<compile_context>
chip_gen: v7x
topology: tpu7x:2x2x1
jax: 0.10.0
libtpu: 0.0.40
codegen_flags: <defaults>
</compile_context>

<pallas_src>
import jax
import jax.numpy as jnp
from jax import lax
from jax.experimental import pallas as pl
from jax.experimental.pallas import tpu as pltpu


def rnn_kernel(xproj_ref, whh_ref, wfc_ref, bfc_ref, out_ref):
    """One batch block of the RNN forward (recurrence + fc + softmax).

    xproj_ref : (L*TB, H)  time-major fused input projection (mxu dtype)
                row r = t*TB + b  ->  emb[ids[b, t]] @ W_ih.T + b_ih + b_hh
    whh_ref   : (H, H)     W_hh.T                          (mxu dtype)
    wfc_ref   : (H, OPAD)  fc weight.T, zero-padded to 128 lanes (mxu dtype)
    bfc_ref   : (1, OPAD)  fc bias, padded with -1e30      (f32)
    out_ref   : (TB, OPAD) f32 softmax probs (padded classes exactly 0)
    """
    TB = out_ref.shape[0]
    H = whh_ref.shape[0]
    L = xproj_ref.shape[0] // TB

    whh = whh_ref[...]                      # resident; hoisted out of the loop
    mxu_dtype = whh.dtype

    def step(t, h):
        base = pl.multiple_of(t * TB, TB)   # aligned sublane slice
        x_t = xproj_ref[pl.ds(base, TB), :].astype(jnp.float32)
        pre = x_t + jnp.dot(h.astype(mxu_dtype), whh,
                            preferred_element_type=jnp.float32)
        return jnp.tanh(pre)

    h0 = jnp.zeros((TB, H), jnp.float32)    # nn.RNN default h0 = 0
    h = lax.fori_loop(0, L, step, h0, unroll=True)

    # fc + lane-dense softmax (padded lanes: logits = -1e30 -> exp == 0)
    logits = jnp.dot(h.astype(mxu_dtype), wfc_ref[...],
                     preferred_element_type=jnp.float32) + bfc_ref[...]
    m = jnp.max(logits, axis=-1, keepdims=True)
    e = jnp.exp(logits - m)
    # Exact divide (not approx reciprocal) so rows sum to 1 at f32 precision.
    out_ref[...] = e / jnp.sum(e, axis=-1, keepdims=True)


def _round_up(x, m):
    return (x + m - 1) // m * m


def rnn_forward(input_ids, emb_table, w_ih, w_hh, b_ih, b_hh, w_fc, b_fc,
                *, block_b=128, mxu_dtype=jnp.bfloat16):
    """Full RNNModel.forward.

    Embedding gather + per-token input projection (pure XLA glue) are hoisted
    to the wrapper; the Pallas kernel fuses the serial recurrence, the fc layer
    and the softmax with all weights kept VMEM-resident.
    """
    B, L = input_ids.shape
    V, D = emb_table.shape
    H = w_hh.shape[0]
    O = w_fc.shape[0]
    OPAD = 128                                  # lane-dense output tile

    # batch tile: multiple of 8 sublanes; pad batch up to a multiple of it
    TB = min(block_b, max(B, 8))
    TB = _round_up(TB, 8)
    Bp = _round_up(B, TB)
    G = Bp // TB                                # keep G >= 2 on v7x when B allows

    # ---- input-independent parameter prep --------------------------------
    f32 = jnp.float32
    wf = emb_table.astype(f32) @ w_ih.T.astype(f32)              # (V, H) fused E @ W_ih.T
    b_comb = (b_ih + b_hh).astype(f32)                           # (H,)
    whh_t = w_hh.T.astype(mxu_dtype)                             # (H, H)
    wfc_pad = (jnp.zeros((H, OPAD), f32).at[:, :O].set(w_fc.T.astype(f32))
               .astype(mxu_dtype))                               # (H, OPAD)
    bfc_pad = jnp.full((1, OPAD), -1e30, f32).at[0, :O].set(b_fc.astype(f32))

    # ---- per-forward: embedding gather + input projection (XLA) ----------
    ids = input_ids
    if Bp != B:
        ids = jnp.pad(ids, ((0, Bp - B), (0, 0)))                # padded rows sliced off
    xproj = wf[ids] + b_comb                                     # (Bp, L, H) f32
    # time-major layout per batch block: row r = t*TB + b
    xproj_tm = (xproj.reshape(G, TB, L, H)
                .transpose(0, 2, 1, 3)
                .reshape(G, L * TB, H)
                .astype(mxu_dtype))

    # ---- explicit VMEM budget (headroom, capped below scoped defaults) ----
    isz = jnp.dtype(mxu_dtype).itemsize
    resident = (2 * L * TB * H * isz                  # xproj block (double-buffered)
                + 2 * (H * H + H * OPAD) * isz        # resident weights
                + 2 * OPAD * 4                        # fc bias
                + 2 * TB * OPAD * 4                   # output block
                + 4 * TB * H * 4)                     # live recurrence temporaries
    vmem_limit = int(min(max(2 * resident, 8 << 20), 32 << 20))

    out_pad = pl.pallas_call(
        rnn_kernel,
        out_shape=jax.ShapeDtypeStruct((Bp, OPAD), jnp.float32),
        grid=(G,),
        in_specs=[
            pl.BlockSpec((None, L * TB, H), lambda i: (i, 0, 0)),  # per-block xproj
            pl.BlockSpec((H, H), lambda i: (0, 0)),        # weights stay resident
            pl.BlockSpec((H, OPAD), lambda i: (0, 0)),
            pl.BlockSpec((1, OPAD), lambda i: (0, 0)),
        ],
        out_specs=pl.BlockSpec((TB, OPAD), lambda i: (i, 0)),
        compiler_params=pltpu.CompilerParams(
            dimension_semantics=("parallel",),   # shard batch blocks across TCs
            vmem_limit_bytes=vmem_limit),
    )(xproj_tm, whh_t, wfc_pad, bfc_pad)

    return out_pad[:B, :O]


def rnn_reference(input_ids, emb_table, w_ih, w_hh, b_ih, b_hh, w_fc, b_fc):
    """Pure-JAX f32 reference mirroring the PyTorch RNNModel.forward exactly."""
    x = emb_table[input_ids]                       # (B, L, D)  == nn.Embedding
    B, L, _ = x.shape
    H = w_hh.shape[0]
    h = jnp.zeros((B, H), jnp.float32)             # nn.RNN default h0 = 0
    for t in range(L):                             # single-layer tanh RNN, batch_first
        h = jnp.tanh(x[:, t, :] @ w_ih.T + b_ih + h @ w_hh.T + b_hh)
    logits = h @ w_fc.T + b_fc                     # fc on hn.squeeze(0)
    return jax.nn.softmax(logits, axis=1)          # Softmax(dim=1)


if __name__ == "__main__":
    # Small shapes consistent with the module (embedding_dim=128, hidden_dim=64,
    # output_dim=5 bins); vocab kept small for the demo.
    B = 16          # batch
    L = 16          # sequence length (max_length stand-in)
    V = 1000        # vocab_size stand-in
    D = 128         # embedding_dim
    H = 64          # hidden_dim
    O = 5           # output_dim (5 complexity bins)

    key = jax.random.PRNGKey(0)
    ks = jax.random.split(key, 8)

    input_ids = jax.random.randint(ks[0], (B, L), 0, V, dtype=jnp.int32)
    emb_table = jax.random.normal(ks[1], (V, D), jnp.float32) * 0.1
    w_ih = jax.random.normal(ks[2], (H, D), jnp.float32) * 0.05   # rnn.weight_ih_l0
    w_hh = jax.random.normal(ks[3], (H, H), jnp.float32) * 0.05   # rnn.weight_hh_l0
    b_ih = jax.random.normal(ks[4], (H,), jnp.float32) * 0.05     # rnn.bias_ih_l0
    b_hh = jax.random.normal(ks[5], (H,), jnp.float32) * 0.05     # rnn.bias_hh_l0
    w_fc = jax.random.normal(ks[6], (O, H), jnp.float32) * 0.05   # fc.weight
    b_fc = jax.random.normal(ks[7], (O,), jnp.float32) * 0.05     # fc.bias

    # block_b=8 keeps G=2 grid blocks at this tiny demo batch (exercises the
    # pipelined grid / both TCs); production default is block_b=128.
    out = rnn_forward(input_ids, emb_table, w_ih, w_hh, b_ih, b_hh, w_fc, b_fc,
                      block_b=8)
    out = jax.block_until_ready(out)

    ref = rnn_reference(input_ids, emb_table, w_ih, w_hh, b_ih, b_hh, w_fc, b_fc)
    assert out.shape == (B, O)
    # Tolerance covers bf16 MXU operands (weights + xproj); accumulation is f32.
    assert jnp.allclose(out, ref, atol=3e-3, rtol=3e-3), (out, ref)
    # Exact softmax divide -> rows sum to 1 at f32 precision.
    assert jnp.allclose(jnp.sum(out, axis=1), 1.0, atol=1e-4)

    print("KERNEL_OK")
</pallas_src>

<mosaic_0001>
module attributes {stable_mosaic.version = 11 : i64} {
  func.func @rnn_kernel(%arg0: i32, %arg1: memref<1x128x64xbf16, #tpu.memory_space<vmem>>, %arg2: memref<64x64xbf16, #tpu.memory_space<vmem>>, %arg3: memref<64x128xbf16, #tpu.memory_space<vmem>>, %arg4: memref<1x128xf32, #tpu.memory_space<vmem>>, %arg5: memref<8x128xf32, #tpu.memory_space<vmem>>) attributes {dimension_semantics = [#tpu.dimension_semantics<parallel>], iteration_bounds = array<i64: 2>, scalar_prefetch = 0 : i64, scratch_operands = 0 : i64, tpu.core_type = #tpu.core_type<tc>, window_params = [{transform_indices = @transform_0, window_bounds = array<i64: 1, 128, 64>}, {pipeline_mode = #tpu.pipeline_mode<synchronous>, transform_indices = @transform_1, window_bounds = array<i64: 64, 64>}, {pipeline_mode = #tpu.pipeline_mode<synchronous>, transform_indices = @transform_2, window_bounds = array<i64: 64, 128>}, {pipeline_mode = #tpu.pipeline_mode<synchronous>, transform_indices = @transform_3, window_bounds = array<i64: 1, 128>}, {transform_indices = @transform_4, window_bounds = array<i64: 8, 128>}]} {
    %c0 = arith.constant 0 : index
    %c0_0 = arith.constant 0 : index
    %0 = vector.load %arg2[%c0, %c0_0] : memref<64x64xbf16, #tpu.memory_space<vmem>>, vector<64x64xbf16>
    %cst = arith.constant 0.000000e+00 : f32
    %1 = vector.broadcast %cst : f32 to vector<8x64xf32>
    %c0_i32 = arith.constant 0 : i32
    %c8_i32 = arith.constant 8 : i32
    %2 = arith.muli %c0_i32, %c8_i32 : i32
    %3 = tpu.assume_multiple %2, 8 : i32
    %c0_1 = arith.constant 0 : index
    %4 = arith.index_cast %3 : i32 to index
    %c0_2 = arith.constant 0 : index
    %5 = vector.load %arg1[%c0_1, %4, %c0_2] : memref<1x128x64xbf16, #tpu.memory_space<vmem>>, vector<1x8x64xbf16>
    %6 = vector.shape_cast %5 : vector<1x8x64xbf16> to vector<8x64xbf16>
    %7 = arith.extf %6 : vector<8x64xbf16> to vector<8x64xf32>
    %8 = arith.truncf %1 : vector<8x64xf32> to vector<8x64xbf16>
    %cst_3 = arith.constant dense<0.000000e+00> : vector<8x64xf32>
    %9 = tpu.matmul %8, %0, %cst_3 {dimension_numbers = #tpu.dot_dimension_numbers<[1], [0], [0], [1], [0, 0, 1, 1], [], []>} : vector<8x64xbf16>, vector<64x64xbf16>, vector<8x64xf32> -> vector<8x64xf32>
    %10 = arith.addf %7, %9 : vector<8x64xf32>
    %11 = math.tanh %10 : vector<8x64xf32>
    %c1_i32 = arith.constant 1 : i32
    %c8_i32_4 = arith.constant 8 : i32
    %12 = arith.muli %c1_i32, %c8_i32_4 : i32
    %13 = tpu.assume_multiple %12, 8 : i32
    %c0_5 = arith.constant 0 : index
    %14 = arith.index_cast %13 : i32 to index
    %c0_6 = arith.constant 0 : index
    %15 = vector.load %arg1[%c0_5, %14, %c0_6] : memref<1x128x64xbf16, #tpu.memory_space<vmem>>, vector<1x8x64xbf16>
    %16 = vector.shape_cast %15 : vector<1x8x64xbf16> to vector<8x64xbf16>
    %17 = arith.extf %16 : vector<8x64xbf16> to vector<8x64xf32>
    %18 = arith.truncf %11 : vector<8x64xf32> to vector<8x64xbf16>
    %cst_7 = arith.constant dense<0.000000e+00> : vector<8x64xf32>
    %19 = tpu.matmul %18, %0, %cst_7 {dimension_numbers = #tpu.dot_dimension_numbers<[1], [0], [0], [1], [0, 0, 1, 1], [], []>} : vector<8x64xbf16>, vector<64x64xbf16>, vector<8x64xf32> -> vector<8x64xf32>
    %20 = arith.addf %17, %19 : vector<8x64xf32>
    %21 = math.tanh %20 : vector<8x64xf32>
    %c2_i32 = arith.constant 2 : i32
    %c8_i32_8 = arith.constant 8 : i32
    %22 = arith.muli %c2_i32, %c8_i32_8 : i32
    %23 = tpu.assume_multiple %22, 8 : i32
    %c0_9 = arith.constant 0 : index
    %24 = arith.index_cast %23 : i32 to index
    %c0_10 = arith.constant 0 : index
    %25 = vector.load %arg1[%c0_9, %24, %c0_10] : memref<1x128x64xbf16, #tpu.memory_space<vmem>>, vector<1x8x64xbf16>
    %26 = vector.shape_cast %25 : vector<1x8x64xbf16> to vector<8x64xbf16>
    %27 = arith.extf %26 : vector<8x64xbf16> to vector<8x64xf32>
    %28 = arith.truncf %21 : vector<8x64xf32> to vector<8x64xbf16>
    %cst_11 = arith.constant dense<0.000000e+00> : vector<8x64xf32>
    %29 = tpu.matmul %28, %0, %cst_11 {dimension_numbers = #tpu.dot_dimension_numbers<[1], [0], [0], [1], [0, 0, 1, 1], [], []>} : vector<8x64xbf16>, vector<64x64xbf16>, vector<8x64xf32> -> vector<8x64xf32>
    %30 = arith.addf %27, %29 : vector<8x64xf32>
    %31 = math.tanh %30 : vector<8x64xf32>
    %c3_i32 = arith.constant 3 : i32
    %c8_i32_12 = arith.constant 8 : i32
    %32 = arith.muli %c3_i32, %c8_i32_12 : i32
    %33 = tpu.assume_multiple %32, 8 : i32
    %c0_13 = arith.constant 0 : index
    %34 = arith.index_cast %33 : i32 to index
    %c0_14 = arith.constant 0 : index
    %35 = vector.load %arg1[%c0_13, %34, %c0_14] : memref<1x128x64xbf16, #tpu.memory_space<vmem>>, vector<1x8x64xbf16>
    %36 = vector.shape_cast %35 : vector<1x8x64xbf16> to vector<8x64xbf16>
    %37 = arith.extf %36 : vector<8x64xbf16> to vector<8x64xf32>
    %38 = arith.truncf %31 : vector<8x64xf32> to vector<8x64xbf16>
    %cst_15 = arith.constant dense<0.000000e+00> : vector<8x64xf32>
    %39 = tpu.matmul %38, %0, %cst_15 {dimension_numbers = #tpu.dot_dimension_numbers<[1], [0], [0], [1], [0, 0, 1, 1], [], []>} : vector<8x64xbf16>, vector<64x64xbf16>, vector<8x64xf32> -> vector<8x64xf32>
    %40 = arith.addf %37, %39 : vector<8x64xf32>
    %41 = math.tanh %40 : vector<8x64xf32>
    %c4_i32 = arith.constant 4 : i32
    %c8_i32_16 = arith.constant 8 : i32
    %42 = arith.muli %c4_i32, %c8_i32_16 : i32
    %43 = tpu.assume_multiple %42, 8 : i32
    %c0_17 = arith.constant 0 : index
    %44 = arith.index_cast %43 : i32 to index
    %c0_18 = arith.constant 0 : index
    %45 = vector.load %arg1[%c0_17, %44, %c0_18] : memref<1x128x64xbf16, #tpu.memory_space<vmem>>, vector<1x8x64xbf16>
    %46 = vector.shape_cast %45 : vector<1x8x64xbf16> to vector<8x64xbf16>
    %47 = arith.extf %46 : vector<8x64xbf16> to vector<8x64xf32>
    %48 = arith.truncf %41 : vector<8x64xf32> to vector<8x64xbf16>
    %cst_19 = arith.constant dense<0.000000e+00> : vector<8x64xf32>
    %49 = tpu.matmul %48, %0, %cst_19 {dimension_numbers = #tpu.dot_dimension_numbers<[1], [0], [0], [1], [0, 0, 1, 1], [], []>} : vector<8x64xbf16>, vector<64x64xbf16>, vector<8x64xf32> -> vector<8x64xf32>
    %50 = arith.addf %47, %49 : vector<8x64xf32>
    %51 = math.tanh %50 : vector<8x64xf32>
    %c5_i32 = arith.constant 5 : i32
    %c8_i32_20 = arith.constant 8 : i32
    %52 = arith.muli %c5_i32, %c8_i32_20 : i32
    %53 = tpu.assume_multiple %52, 8 : i32
    %c0_21 = arith.constant 0 : index
    %54 = arith.index_cast %53 : i32 to index
    %c0_22 = arith.constant 0 : index
    %55 = vector.load %arg1[%c0_21, %54, %c0_22] : memref<1x128x64xbf16, #tpu.memory_space<vmem>>, vector<1x8x64xbf16>
    %56 = vector.shape_cast %55 : vector<1x8x64xbf16> to vector<8x64xbf16>
    %57 = arith.extf %56 : vector<8x64xbf16> to vector<8x64xf32>
    %58 = arith.truncf %51 : vector<8x64xf32> to vector<8x64xbf16>
    %cst_23 = arith.constant dense<0.000000e+00> : vector<8x64xf32>
    %59 = tpu.matmul %58, %0, %cst_23 {dimension_numbers = #tpu.dot_dimension_numbers<[1], [0], [0], [1], [0, 0, 1, 1], [], []>} : vector<8x64xbf16>, vector<64x64xbf16>, vector<8x64xf32> -> vector<8x64xf32>
    %60 = arith.addf %57, %59 : vector<8x64xf32>
    %61 = math.tanh %60 : vector<8x64xf32>
    %c6_i32 = arith.constant 6 : i32
    %c8_i32_24 = arith.constant 8 : i32
    %62 = arith.muli %c6_i32, %c8_i32_24 : i32
    %63 = tpu.assume_multiple %62, 8 : i32
    %c0_25 = arith.constant 0 : index
    %64 = arith.index_cast %63 : i32 to index
    %c0_26 = arith.constant 0 : index
    %65 = vector.load %arg1[%c0_25, %64, %c0_26] : memref<1x128x64xbf16, #tpu.memory_space<vmem>>, vector<1x8x64xbf16>
    %66 = vector.shape_cast %65 : vector<1x8x64xbf16> to vector<8x64xbf16>
    %67 = arith.extf %66 : vector<8x64xbf16> to vector<8x64xf32>
    %68 = arith.truncf %61 : vector<8x64xf32> to vector<8x64xbf16>
    %cst_27 = arith.constant dense<0.000000e+00> : vector<8x64xf32>
    %69 = tpu.matmul %68, %0, %cst_27 {dimension_numbers = #tpu.dot_dimension_numbers<[1], [0], [0], [1], [0, 0, 1, 1], [], []>} : vector<8x64xbf16>, vector<64x64xbf16>, vector<8x64xf32> -> vector<8x64xf32>
    %70 = arith.addf %67, %69 : vector<8x64xf32>
    %71 = math.tanh %70 : vector<8x64xf32>
    %c7_i32 = arith.constant 7 : i32
    %c8_i32_28 = arith.constant 8 : i32
    %72 = arith.muli %c7_i32, %c8_i32_28 : i32
    %73 = tpu.assume_multiple %72, 8 : i32
    %c0_29 = arith.constant 0 : index
    %74 = arith.index_cast %73 : i32 to index
    %c0_30 = arith.constant 0 : index
    %75 = vector.load %arg1[%c0_29, %74, %c0_30] : memref<1x128x64xbf16, #tpu.memory_space<vmem>>, vector<1x8x64xbf16>
    %76 = vector.shape_cast %75 : vector<1x8x64xbf16> to vector<8x64xbf16>
    %77 = arith.extf %76 : vector<8x64xbf16> to vector<8x64xf32>
    %78 = arith.truncf %71 : vector<8x64xf32> to vector<8x64xbf16>
    %cst_31 = arith.constant dense<0.000000e+00> : vector<8x64xf32>
    %79 = tpu.matmul %78, %0, %cst_31 {dimension_numbers = #tpu.dot_dimension_numbers<[1], [0], [0], [1], [0, 0, 1, 1], [], []>} : vector<8x64xbf16>, vector<64x64xbf16>, vector<8x64xf32> -> vector<8x64xf32>
    %80 = arith.addf %77, %79 : vector<8x64xf32>
    %81 = math.tanh %80 : vector<8x64xf32>
    %c8_i32_32 = arith.constant 8 : i32
    %c8_i32_33 = arith.constant 8 : i32
    %82 = arith.muli %c8_i32_32, %c8_i32_33 : i32
    %83 = tpu.assume_multiple %82, 8 : i32
    %c0_34 = arith.constant 0 : index
    %84 = arith.index_cast %83 : i32 to index
    %c0_35 = arith.constant 0 : index
    %85 = vector.load %arg1[%c0_34, %84, %c0_35] : memref<1x128x64xbf16, #tpu.memory_space<vmem>>, vector<1x8x64xbf16>
    %86 = vector.shape_cast %85 : vector<1x8x64xbf16> to vector<8x64xbf16>
    %87 = arith.extf %86 : vector<8x64xbf16> to vector<8x64xf32>
    %88 = arith.truncf %81 : vector<8x64xf32> to vector<8x64xbf16>
    %cst_36 = arith.constant dense<0.000000e+00> : vector<8x64xf32>
    %89 = tpu.matmul %88, %0, %cst_36 {dimension_numbers = #tpu.dot_dimension_numbers<[1], [0], [0], [1], [0, 0, 1, 1], [], []>} : vector<8x64xbf16>, vector<64x64xbf16>, vector<8x64xf32> -> vector<8x64xf32>
    %90 = arith.addf %87, %89 : vector<8x64xf32>
    %91 = math.tanh %90 : vector<8x64xf32>
    %c9_i32 = arith.constant 9 : i32
    %c8_i32_37 = arith.constant 8 : i32
    %92 = arith.muli %c9_i32, %c8_i32_37 : i32
    %93 = tpu.assume_multiple %92, 8 : i32
    %c0_38 = arith.constant 0 : index
    %94 = arith.index_cast %93 : i32 to index
    %c0_39 = arith.constant 0 : index
    %95 = vector.load %arg1[%c0_38, %94, %c0_39] : memref<1x128x64xbf16, #tpu.memory_space<vmem>>, vector<1x8x64xbf16>
    %96 = vector.shape_cast %95 : vector<1x8x64xbf16> to vector<8x64xbf16>
    %97 = arith.extf %96 : vector<8x64xbf16> to vector<8x64xf32>
    %98 = arith.truncf %91 : vector<8x64xf32> to vector<8x64xbf16>
    %cst_40 = arith.constant dense<0.000000e+00> : vector<8x64xf32>
    %99 = tpu.matmul %98, %0, %cst_40 {dimension_numbers = #tpu.dot_dimension_numbers<[1], [0], [0], [1], [0, 0, 1, 1], [], []>} : vector<8x64xbf16>, vector<64x64xbf16>, vector<8x64xf32> -> vector<8x64xf32>
    %100 = arith.addf %97, %99 : vector<8x64xf32>
    %101 = math.tanh %100 : vector<8x64xf32>
    %c10_i32 = arith.constant 10 : i32
    %c8_i32_41 = arith.constant 8 : i32
    %102 = arith.muli %c10_i32, %c8_i32_41 : i32
    %103 = tpu.assume_multiple %102, 8 : i32
    %c0_42 = arith.constant 0 : index
    %104 = arith.index_cast %103 : i32 to index
    %c0_43 = arith.constant 0 : index
    %105 = vector.load %arg1[%c0_42, %104, %c0_43] : memref<1x128x64xbf16, #tpu.memory_space<vmem>>, vector<1x8x64xbf16>
    %106 = vector.shape_cast %105 : vector<1x8x64xbf16> to vector<8x64xbf16>
    %107 = arith.extf %106 : vector<8x64xbf16> to vector<8x64xf32>
    %108 = arith.truncf %101 : vector<8x64xf32> to vector<8x64xbf16>
    %cst_44 = arith.constant dense<0.000000e+00> : vector<8x64xf32>
    %109 = tpu.matmul %108, %0, %cst_44 {dimension_numbers = #tpu.dot_dimension_numbers<[1], [0], [0], [1], [0, 0, 1, 1], [], []>} : vector<8x64xbf16>, vector<64x64xbf16>, vector<8x64xf32> -> vector<8x64xf32>
    %110 = arith.addf %107, %109 : vector<8x64xf32>
    %111 = math.tanh %110 : vector<8x64xf32>
    %c11_i32 = arith.constant 11 : i32
    %c8_i32_45 = arith.constant 8 : i32
    %112 = arith.muli %c11_i32, %c8_i32_45 : i32
    %113 = tpu.assume_multiple %112, 8 : i32
    %c0_46 = arith.constant 0 : index
    %114 = arith.index_cast %113 : i32 to index
    %c0_47 = arith.constant 0 : index
    %115 = vector.load %arg1[%c0_46, %114, %c0_47] : memref<1x128x64xbf16, #tpu.memory_space<vmem>>, vector<1x8x64xbf16>
    %116 = vector.shape_cast %115 : vector<1x8x64xbf16> to vector<8x64xbf16>
    %117 = arith.extf %116 : vector<8x64xbf16> to vector<8x64xf32>
    %118 = arith.truncf %111 : vector<8x64xf32> to vector<8x64xbf16>
    %cst_48 = arith.constant dense<0.000000e+00> : vector<8x64xf32>
    %119 = tpu.matmul %118, %0, %cst_48 {dimension_numbers = #tpu.dot_dimension_numbers<[1], [0], [0], [1], [0, 0, 1, 1], [], []>} : vector<8x64xbf16>, vector<64x64xbf16>, vector<8x64xf32> -> vector<8x64xf32>
    %120 = arith.addf %117, %119 : vector<8x64xf32>
    %121 = math.tanh %120 : vector<8x64xf32>
    %c12_i32 = arith.constant 12 : i32
    %c8_i32_49 = arith.constant 8 : i32
    %122 = arith.muli %c12_i32, %c8_i32_49 : i32
    %123 = tpu.assume_multiple %122, 8 : i32
    %c0_50 = arith.constant 0 : index
    %124 = arith.index_cast %123 : i32 to index
    %c0_51 = arith.constant 0 : index
    %125 = vector.load %arg1[%c0_50, %124, %c0_51] : memref<1x128x64xbf16, #tpu.memory_space<vmem>>, vector<1x8x64xbf16>
    %126 = vector.shape_cast %125 : vector<1x8x64xbf16> to vector<8x64xbf16>
    %127 = arith.extf %126 : vector<8x64xbf16> to vector<8x64xf32>
    %128 = arith.truncf %121 : vector<8x64xf32> to vector<8x64xbf16>
    %cst_52 = arith.constant dense<0.000000e+00> : vector<8x64xf32>
    %129 = tpu.matmul %128, %0, %cst_52 {dimension_numbers = #tpu.dot_dimension_numbers<[1], [0], [0], [1], [0, 0, 1, 1], [], []>} : vector<8x64xbf16>, vector<64x64xbf16>, vector<8x64xf32> -> vector<8x64xf32>
    %130 = arith.addf %127, %129 : vector<8x64xf32>
    %131 = math.tanh %130 : vector<8x64xf32>
    %c13_i32 = arith.constant 13 : i32
    %c8_i32_53 = arith.constant 8 : i32
    %132 = arith.muli %c13_i32, %c8_i32_53 : i32
    %133 = tpu.assume_multiple %132, 8 : i32
    %c0_54 = arith.constant 0 : index
    %134 = arith.index_cast %133 : i32 to index
    %c0_55 = arith.constant 0 : index
    %135 = vector.load %arg1[%c0_54, %134, %c0_55] : memref<1x128x64xbf16, #tpu.memory_space<vmem>>, vector<1x8x64xbf16>
    %136 = vector.shape_cast %135 : vector<1x8x64xbf16> to vector<8x64xbf16>
    %137 = arith.extf %136 : vector<8x64xbf16> to vector<8x64xf32>
    %138 = arith.truncf %131 : vector<8x64xf32> to vector<8x64xbf16>
    %cst_56 = arith.constant dense<0.000000e+00> : vector<8x64xf32>
    %139 = tpu.matmul %138, %0, %cst_56 {dimension_numbers = #tpu.dot_dimension_numbers<[1], [0], [0], [1], [0, 0, 1, 1], [], []>} : vector<8x64xbf16>, vector<64x64xbf16>, vector<8x64xf32> -> vector<8x64xf32>
    %140 = arith.addf %137, %139 : vector<8x64xf32>
    %141 = math.tanh %140 : vector<8x64xf32>
    %c14_i32 = arith.constant 14 : i32
    %c8_i32_57 = arith.constant 8 : i32
    %142 = arith.muli %c14_i32, %c8_i32_57 : i32
    %143 = tpu.assume_multiple %142, 8 : i32
    %c0_58 = arith.constant 0 : index
    %144 = arith.index_cast %143 : i32 to index
    %c0_59 = arith.constant 0 : index
    %145 = vector.load %arg1[%c0_58, %144, %c0_59] : memref<1x128x64xbf16, #tpu.memory_space<vmem>>, vector<1x8x64xbf16>
    %146 = vector.shape_cast %145 : vector<1x8x64xbf16> to vector<8x64xbf16>
    %147 = arith.extf %146 : vector<8x64xbf16> to vector<8x64xf32>
    %148 = arith.truncf %141 : vector<8x64xf32> to vector<8x64xbf16>
    %cst_60 = arith.constant dense<0.000000e+00> : vector<8x64xf32>
    %149 = tpu.matmul %148, %0, %cst_60 {dimension_numbers = #tpu.dot_dimension_numbers<[1], [0], [0], [1], [0, 0, 1, 1], [], []>} : vector<8x64xbf16>, vector<64x64xbf16>, vector<8x64xf32> -> vector<8x64xf32>
    %150 = arith.addf %147, %149 : vector<8x64xf32>
    %151 = math.tanh %150 : vector<8x64xf32>
    %c15_i32 = arith.constant 15 : i32
    %c8_i32_61 = arith.constant 8 : i32
    %152 = arith.muli %c15_i32, %c8_i32_61 : i32
    %153 = tpu.assume_multiple %152, 8 : i32
    %c0_62 = arith.constant 0 : index
    %154 = arith.index_cast %153 : i32 to index
    %c0_63 = arith.constant 0 : index
    %155 = vector.load %arg1[%c0_62, %154, %c0_63] : memref<1x128x64xbf16, #tpu.memory_space<vmem>>, vector<1x8x64xbf16>
    %156 = vector.shape_cast %155 : vector<1x8x64xbf16> to vector<8x64xbf16>
    %157 = arith.extf %156 : vector<8x64xbf16> to vector<8x64xf32>
    %158 = arith.truncf %151 : vector<8x64xf32> to vector<8x64xbf16>
    %cst_64 = arith.constant dense<0.000000e+00> : vector<8x64xf32>
    %159 = tpu.matmul %158, %0, %cst_64 {dimension_numbers = #tpu.dot_dimension_numbers<[1], [0], [0], [1], [0, 0, 1, 1], [], []>} : vector<8x64xbf16>, vector<64x64xbf16>, vector<8x64xf32> -> vector<8x64xf32>
    %160 = arith.addf %157, %159 : vector<8x64xf32>
    %161 = math.tanh %160 : vector<8x64xf32>
    %c16_i32 = arith.constant 16 : i32
    %162 = arith.truncf %161 : vector<8x64xf32> to vector<8x64xbf16>
    %c0_65 = arith.constant 0 : index
    %c0_66 = arith.constant 0 : index
    %163 = vector.load %arg3[%c0_65, %c0_66] : memref<64x128xbf16, #tpu.memory_space<vmem>>, vector<64x128xbf16>
    %cst_67 = arith.constant dense<0.000000e+00> : vector<8x128xf32>
    %164 = tpu.matmul %162, %163, %cst_67 {dimension_numbers = #tpu.dot_dimension_numbers<[1], [0], [0], [1], [0, 0, 1, 1], [], []>} : vector<8x64xbf16>, vector<64x128xbf16>, vector<8x128xf32> -> vector<8x128xf32>
    %c0_68 = arith.constant 0 : index
    %c0_69 = arith.constant 0 : index
    %165 = vector.load %arg4[%c0_68, %c0_69] : memref<1x128xf32, #tpu.memory_space<vmem>>, vector<1x128xf32>
    %166 = vector.broadcast %165 : vector<1x128xf32> to vector<8x128xf32>
    %167 = arith.addf %164, %166 : vector<8x128xf32>
    %cst_70 = arith.constant dense<0xFF800000> : vector<8xf32>
    %168 = vector.multi_reduction <maximumf>, %167, %cst_70 [1] : vector<8x128xf32> to vector<8xf32>
    %169 = vector.shape_cast %168 : vector<8xf32> to vector<8x1xf32>
    %170 = vector.broadcast %169 : vector<8x1xf32> to vector<8x128xf32>
    %171 = arith.subf %167, %170 : vector<8x128xf32>
    %172 = math.exp %171 : vector<8x128xf32>
    %cst_71 = arith.constant dense<0.000000e+00> : vector<8xf32>
    %173 = vector.multi_reduction <add>, %172, %cst_71 [1] : vector<8x128xf32> to vector<8xf32>
    %174 = vector.shape_cast %173 : vector<8xf32> to vector<8x1xf32>
    %175 = vector.broadcast %174 : vector<8x1xf32> to vector<8x128xf32>
    %176 = arith.divf %172, %175 : vector<8x128xf32>
    %c0_72 = arith.constant 0 : index
    %c0_73 = arith.constant 0 : index
    %177 = vector.load %arg5[%c0_72, %c0_73] : memref<8x128xf32, #tpu.memory_space<vmem>>, vector<8x128xf32>
    tpu.vector_store %arg5[%c0_72, %c0_73], %176 {strides = array<i32>} : memref<8x128xf32, #tpu.memory_space<vmem>>, vector<8x128xf32>,
    return
  }
  func.func @transform_0(%arg0: i32) -> (i32, i32, i32) {
    %c0_i32 = arith.constant 0 : i32
    %c0_i32_0 = arith.constant 0 : i32
    %c0_i32_1 = arith.constant 0 : i32
    return %arg0, %c0_i32, %c0_i32_0 : i32, i32, i32
  }
  func.func @transform_1(%arg0: i32) -> (i32, i32) {
    %c0_i32 = arith.constant 0 : i32
    %c0_i32_0 = arith.constant 0 : i32
    %c0_i32_1 = arith.constant 0 : i32
    return %c0_i32, %c0_i32_0 : i32, i32
  }
  func.func @transform_2(%arg0: i32) -> (i32, i32) {
    %c0_i32 = arith.constant 0 : i32
    %c0_i32_0 = arith.constant 0 : i32
    %c0_i32_1 = arith.constant 0 : i32
    return %c0_i32, %c0_i32_0 : i32, i32
  }
  func.func @transform_3(%arg0: i32) -> (i32, i32) {
    %c0_i32 = arith.constant 0 : i32
    %c0_i32_0 = arith.constant 0 : i32
    %c0_i32_1 = arith.constant 0 : i32
    return %c0_i32, %c0_i32_0 : i32, i32
  }
  func.func @transform_4(%arg0: i32) -> (i32, i32) {
    %c0_i32 = arith.constant 0 : i32
    %c0_i32_0 = arith.constant 0 : i32
    return %arg0, %c0_i32 : i32, i32
  }
}

</mosaic_0001>

<llo_original>
// kernel: tpu_custom_call.1
$region0: #{tpu_custom_call.1}
  #allocation0 [shape = 'u32[]', space=smem, size = 0x4, offset = 0x4, fixed_abs, tag = 'smem constant byte address 0x4 - core index']
  #allocation1 [shape = 'u32[144,128]{1,0:T(1,128)}', space=vmem, size = 0x12000, scoped, tag = 'internal scratch']
  %s0 = inlined_call_operand.vmem [shape: bf16[2,128,64], index: 0, kind: input, shape index: {}]
  %s1 = inlined_call_operand.vmem [shape: bf16[64,64], index: 1, kind: input, shape index: {}]
  %s2 = inlined_call_operand.vmem [shape: bf16[64,128], index: 2, kind: input, shape index: {}]
  %s3 = inlined_call_operand.vmem [shape: f32[1,128], index: 3, kind: input, shape index: {}]
  %s4 = inlined_call_operand.hbm [shape: f32[16,128], index: 4, kind: output, shape index: {}]
  %s5 = sld [smem:[#allocation0]]
  $region49: #{tpu_custom_call.1} parent=0
    _
  %s7 = ssub.s32 1, %s5
  %s8 = scalar_select 0, %s7, %s5
  $region1: #{tpu_custom_call.1} parent=0
    #allocation2 [shape = 'u8[8192]{0}', space=vmem, size = 0x2000, scoped, tag = 'output window, operand 0']
    #allocation3 [shape = 's32[2]{0}', space=sflag, size = 0x8, scoped, tag = 'scoped memory for tpu_custom_call.1']
    %9 = vsyncpa [#allocation3], 0
    %s10 = scalar_lea.sflag [#allocation3], 1
    %11 = vsyncpa %s10, 0
    loop: start=0, step=1, limit=4
    $region2: #{tpu_custom_call.1} parent=1 // loop_pre_header
      _
    $region3: #{tpu_custom_call.1} parent=1 // loop_header
      %s13 = sphi 0, %s17
      %p14 = scmp.ge.s32.totalorder %s13, 4
      %s23 = sphi 0, %s25
      %s26 = sphi 0, %s23
      %s27 = sphi 0, %s26
      %s43 = sphi 0, %s27
      %s47 = sphi 0, %s47
      %s49 = sphi 0, %s47
      %s50 = sphi 0, %s49
      %s64 = sphi 0, %s50
      %s68 = sphi 0, %s68
      %s70 = sphi 0, %s68
      %s71 = sphi 0, %s70
      %s85 = sphi 0, %s71
      %s89 = sphi 0, %s89
      %s91 = sphi 0, %s89
      %s92 = sphi 0, %s91
      %s106 = sphi 0, %s92
      %s112 = sphi 0, %s114
      %s115 = sphi 0, %s112
      %s116 = sphi 0, %s115
      %s132 = sphi 0, %s116
    $region4: #{tpu_custom_call.1} parent=1 // loop_header_branch
      %16 = sbr.rel (%p14) target = $region8
    $region5: #{tpu_custom_call.1} parent=1 // loop_body
      %s18 = ssub.s32 %s13, 1
      %s19 = ssub.s32 %s13, 2
      %s20 = sadd.s32 %s13, 1
      %s21 = ssub.s32 %s13, %s20
      %p22 = scmp.eq.s32.totalorder %s21, 0
      %s24 = sadd.s32 %s23, 1
      %s25 = scalar_select %p22, %s23, %s24
      %p28 = pneg %p22
      %p29 = scmp.eq.s32.totalorder %s13, 1
      %p30 = por %p28, %p29
      %p31 = scmp.ne.s32.totalorder %s23, %s26
      %p32 = scmp.eq.s32.totalorder %s13, 0
      %p33 = por %p31, %p32
      %p34 = scmp.ne.s32.totalorder %s23, %s26
      %p35 = scmp.eq.s32.totalorder %s18, 1
      %p36 = por %p34, %p35
      %p37 = scmp.ne.s32.totalorder %s26, %s27
      %p38 = scmp.eq.s32.totalorder %s18, 0
      %p39 = por %p37, %p38
      %p40 = scmp.ne.s32.totalorder %s26, %s27
      %p41 = scmp.eq.s32.totalorder %s19, 1
      %p42 = por %p40, %p41
      %p44 = scmp.ne.s32.totalorder %s27, %s43
      %p45 = scmp.eq.s32.totalorder %s19, 0
      %p46 = por %p44, %p45
      %s48 = sadd.s32 %s47, 1
      %p51 = scmp.eq.s32.totalorder %s13, 1
      %p52 = scmp.ne.s32.totalorder %s47, %s49
      %p53 = scmp.eq.s32.totalorder %s13, 0
      %p54 = por %p52, %p53
      %p55 = scmp.ne.s32.totalorder %s47, %s49
      %p56 = scmp.eq.s32.totalorder %s18, 1
      %p57 = por %p55, %p56
      %p58 = scmp.ne.s32.totalorder %s49, %s50
      %p59 = scmp.eq.s32.totalorder %s18, 0
      %p60 = por %p58, %p59
      %p61 = scmp.ne.s32.totalorder %s49, %s50
      %p62 = scmp.eq.s32.totalorder %s19, 1
      %p63 = por %p61, %p62
      %p65 = scmp.ne.s32.totalorder %s50, %s64
      %p66 = scmp.eq.s32.totalorder %s19, 0
      %p67 = por %p65, %p66
      %s69 = sadd.s32 %s68, 1
      %p72 = scmp.eq.s32.totalorder %s13, 1
      %p73 = scmp.ne.s32.totalorder %s68, %s70
      %p74 = scmp.eq.s32.totalorder %s13, 0
      %p75 = por %p73, %p74
      %p76 = scmp.ne.s32.totalorder %s68, %s70
      %p77 = scmp.eq.s32.totalorder %s18, 1
      %p78 = por %p76, %p77
      %p79 = scmp.ne.s32.totalorder %s70, %s71
      %p80 = scmp.eq.s32.totalorder %s18, 0
      %p81 = por %p79, %p80
      %p82 = scmp.ne.s32.totalorder %s70, %s71
      %p83 = scmp.eq.s32.totalorder %s19, 1
      %p84 = por %p82, %p83
      %p86 = scmp.ne.s32.totalorder %s71, %s85
      %p87 = scmp.eq.s32.totalorder %s19, 0
      %p88 = por %p86, %p87
      %s90 = sadd.s32 %s89, 1
      %p93 = scmp.eq.s32.totalorder %s13, 1
      %p94 = scmp.ne.s32.totalorder %s89, %s91
      %p95 = scmp.eq.s32.totalorder %s13, 0
      %p96 = por %p94, %p95
      %p97 = scmp.ne.s32.totalorder %s89, %s91
      %p98 = scmp.eq.s32.totalorder %s18, 1
      %p99 = por %p97, %p98
      %p100 = scmp.ne.s32.totalorder %s91, %s92
      %p101 = scmp.eq.s32.totalorder %s18, 0
      %p102 = por %p100, %p101
      %p103 = scmp.ne.s32.totalorder %s91, %s92
      %p104 = scmp.eq.s32.totalorder %s19, 1
      %p105 = por %p103, %p104
      %p107 = scmp.ne.s32.totalorder %s92, %s106
      %p108 = scmp.eq.s32.totalorder %s19, 0
      %p109 = por %p107, %p108
      %s110 = ssub.s32 %s13, %s20
      %p111 = scmp.eq.s32.totalorder %s110, 0
      %s113 = sadd.s32 %s112, 1
      %s114 = scalar_select %p111, %s112, %s113
      %p117 = pneg %p111
      %p118 = scmp.eq.s32.totalorder %s13, 1
      %p119 = por %p117, %p118
      %p120 = scmp.ne.s32.totalorder %s112, %s115
      %p121 = scmp.eq.s32.totalorder %s13, 0
      %p122 = por %p120, %p121
      %p123 = scmp.ne.s32.totalorder %s112, %s115
      %p124 = scmp.eq.s32.totalorder %s18, 1
      %p125 = por %p123, %p124
      %p126 = scmp.ne.s32.totalorder %s115, %s116
      %p127 = scmp.eq.s32.totalorder %s18, 0
      %p128 = por %p126, %p127
      %p129 = scmp.ne.s32.totalorder %s115, %s116
      %p130 = scmp.eq.s32.totalorder %s19, 1
      %p131 = por %p129, %p130
      %p133 = scmp.ne.s32.totalorder %s116, %s132
      %p134 = scmp.eq.s32.totalorder %s19, 0
      %p135 = por %p133, %p134
      %p136 = scmp.le.s32.totalorder 1, %s13
      %p137 = scmp.lt.s32.totalorder %s13, 3
      %p138 = pnand %p136, %p137
      %p139 = pneg %p138
      // Predicated region
      $region9: #{tpu_custom_call.1} parent=5 // pred_check
        _
      $region10: #{tpu_custom_call.1} parent=5 // pred_check_branch
        %141 = sbr.rel (%p138) target = $region12
      $region11: #{tpu_custom_call.1} parent=5 // pred_region
        %s142 = ssub.s32 %s13, 1
        // Predicated region
        $region13: #{tpu_custom_call.1} parent=11 // pred_check
          %p143 = pneg %p60
        $region14: #{tpu_custom_call.1} parent=11 // pred_check_branch
          %145 = sbr.rel (%p143) target = $region16
        $region15: #{tpu_custom_call.1} parent=11 // pred_region
          _
        $region16: #{tpu_custom_call.1} parent=11 // pred_fallthru
          _
        // Predicated region
        $region17: #{tpu_custom_call.1} parent=11 // pred_check
          %p146 = pneg %p81
        $region18: #{tpu_custom_call.1} parent=11 // pred_check_branch
          %148 = sbr.rel (%p146) target = $region20
        $region19: #{tpu_custom_call.1} parent=11 // pred_region
          _
        $region20: #{tpu_custom_call.1} parent=11 // pred_fallthru
          _
        // Predicated region
        $region21: #{tpu_custom_call.1} parent=11 // pred_check
          %p149 = pneg %p102
        $region22: #{tpu_custom_call.1} parent=11 // pred_check_branch
          %151 = sbr.rel (%p149) target = $region24
        $region23: #{tpu_custom_call.1} parent=11 // pred_region
          _
        $region24: #{tpu_custom_call.1} parent=11 // pred_fallthru
          _
      $region12: #{tpu_custom_call.1} parent=5 // pred_fallthru
        _
      %p152 = scmp.lt.s32.totalorder %s13, 2
      // Predicated region
      $region25: #{tpu_custom_call.1} parent=5 // pred_check
        %p153 = pneg %p152
      $region26: #{tpu_custom_call.1} parent=5 // pred_check_branch
        %155 = sbr.rel (%p153) target = $region28
      $region27: #{tpu_custom_call.1} parent=5 // pred_region
        // Predicated region
        $region29: #{tpu_custom_call.1} parent=27 // pred_check
          %p156 = pneg %p33
        $region30: #{tpu_custom_call.1} parent=27 // pred_check_branch
          %158 = sbr.rel (%p156) target = $region32
        $region31: #{tpu_custom_call.1} parent=27 // pred_region
          %p159 = scmp.lt.s32.totalorder %s13, 1
          %s160 = scalar_select %p159, %s13, 1
          %s161 = smul.addr %s160, 16
          %s162 = smul.addr %s161, 4
          %s163 = scalar_lea.vmem %s0, %s162
        $region32: #{tpu_custom_call.1} parent=27 // pred_fallthru
          _
      $region28: #{tpu_custom_call.1} parent=5 // pred_fallthru
        _
      %p164 = scmp.le.s32.totalorder 1, %s13
      %p165 = scmp.lt.s32.totalorder %s13, 3
      %p166 = pnand %p164, %p165
      %p167 = pneg %p166
      // Predicated region
      $region33: #{tpu_custom_call.1} parent=5 // pred_check
        _
      $region34: #{tpu_custom_call.1} parent=5 // pred_check_branch
        %169 = sbr.rel (%p166) target = $region36
      $region35: #{tpu_custom_call.1} parent=5 // pred_region
        %s170 = ssub.s32 %s13, 1
        %p171 = scmp.lt.s32.totalorder %s18, 1
        %s172 = scalar_select %p171, %s18, 1
        %s173 = smul.addr %s172, 16
        %s174 = smul.addr %s173, 4
        %s175 = scalar_lea.vmem %s0, %s174
        %p176 = pneg %p39
        %p177 = pneg %p36
        %p178 = pneg %p60
        %p179 = pneg %p57
        %p180 = pneg %p81
        %p181 = pneg %p78
        %p182 = pneg %p102
        %p183 = pneg %p99
        %p184 = pneg %p128
        %p185 = pneg %p125
        %s186 = sand.u32 %s115, 1
        %s187 = scalar_lea.sflag [#allocation3], %s186
        %s188 = sand.u32 %s115, 1
        %s189 = smul.addr %s188, 8
        %s190 = scalar_lea.vmem [#allocation2], %s189
        %p191 = scmp.lt.s32.totalorder %s18, 1
        %s192 = scalar_select %p191, %s18, 1
        %s193 = smul.addr %s192, 16
        %s194 = smul.addr %s193, 4
        %s195 = scalar_lea.vmem %s0, %s194
        %v197 = vld [vmem:[%s1] sm:$0xf]
        %v198 = vld [vmem:[%s1 + $0x4] sm:$0xf]
        %v199 = vld [vmem:[%s1 + $0x8] sm:$0xf]
        %v200 = vld [vmem:[%s1 + $0xc] sm:$0xf]
        %v201 = vld [vmem:[%s1 + $0x10] sm:$0xf]
        %v202 = vld [vmem:[%s1 + $0x14] sm:$0xf]
        %v203 = vld [vmem:[%s1 + $0x18] sm:$0xf]
        %v204 = vld [vmem:[%s1 + $0x1c] sm:$0xf]
        %v205 = vld [vmem:[%s195] sm:$0xf]
        %v206 = vunpack.c.l.bf16 %v205
        %v215 = vunpack.c.l.b16 %v197
        %v216 = vunpack.c.l.b16 %v198
        %v217 = vunpack.c.l.b16 %v199
        %v218 = vunpack.c.l.b16 %v200
        %v219 = vunpack.c.l.b16 %v201
        %v220 = vunpack.c.l.b16 %v202
        %v221 = vunpack.c.l.b16 %v203
        %v222 = vunpack.c.l.b16 %v204
        %v223 = vpack.c.b16 %v216, %v215
        %v224 = vpack.c.b16 %v218, %v217
        %v225 = vpack.c.b16 %v220, %v219
        %v226 = vpack.c.b16 %v222, %v221
        %vm231 = vcmask 523264
        %v233 = vsel %vm231, 0, 0
        %235 = vmatprep.subr.bf16.mxu0 0
        %236 = vmatpush1.bf16.msra.mxu0 %v223
        %237 = vmatprep.subr.bf16.mxu0 0
        %238 = vmatpush1.bf16.msra.mxu0 %v224
        %239 = vmatprep.subr.bf16.mxu0 0
        %240 = vmatpush1.bf16.msra.mxu0 %v225
        %241 = vmatprep.subr.bf16.mxu0 0
        %242 = vmatpush1.bf16.msra.mxu0 %v226
        %243 = vmatprep.subr.bf16.mxu0 0
        %244 = vmatpush1.bf16.msra.mxu0 0
        %245 = vmatprep.subr.bf16.mxu0 0
        %246 = vmatpush1.bf16.msra.mxu0 0
        %247 = vmatprep.subr.bf16.mxu0 0
        %248 = vmatpush1.bf16.msra.mxu0 0
        %249 = vmatprep.subr.bf16.mxu0 0
        %250 = vmatpush1.bf16.msra.mxu0 0
        %251 = vmatprep.subr.bf16.mxu0 0
        %252 = vmatpush1.bf16.msra.mxu0 0
        %253 = vmatprep.subr.bf16.mxu0 0
        %254 = vmatpush1.bf16.msra.mxu0 0
        %255 = vmatprep.subr.bf16.mxu0 0
        %256 = vmatpush1.bf16.msra.mxu0 0
        %257 = vmatprep.subr.bf16.mxu0 0
        %258 = vmatpush1.bf16.msra.mxu0 0
        %259 = vmatprep.subr.bf16.mxu0 0
        %260 = vmatpush1.bf16.msra.mxu0 0
        %261 = vmatprep.subr.bf16.mxu0 0
        %262 = vmatpush1.bf16.msra.mxu0 0
        %263 = vmatprep.subr.bf16.mxu0 0
        %264 = vmatpush1.bf16.msra.mxu0 0
        %265 = vmatprep.subr.bf16.mxu0 0
        %266 = vmatpush1.bf16.msra.mxu0 0
        %267 = vmatprep.mubr.bf16.mxu0 0
        %268 = vmatmul.mubr.bf16.gmra.mrb[0].mxu0 %v233
        %v269 = vpop.f32.mrb[0].mxu0
        %v270 = vadd.f32 0.0, %v269
        %v271 = vpop.f32.mrb[0].mxu0
        %v272 = vpop.f32.mrb[0].mxu0
        %v273 = vpop.f32.mrb[0].mxu0
        %274 = vdwg.mxu0
        %v275 = vadd.f32 %v206, %v270
        %v276 = vtanh.pop %v275
        %s277 = scalar_lea.vmem %s195, 4
        %v278 = vld [vmem:[%s277] sm:$0xf]
        %v279 = vunpack.c.l.bf16 %v278
        %v280 = vpack.c.bf16 %v276, %v276
        %v282 = vsel %vm231, %v280, 0
        %284 = vmatprep.subr.bf16.mxu0 0
        %285 = vmatpush1.bf16.msra.mxu0 %v223
        %286 = vmatprep.subr.bf16.mxu0 0
        %287 = vmatpush1.bf16.msra.mxu0 %v224
        %288 = vmatprep.subr.bf16.mxu0 0
        %289 = vmatpush1.bf16.msra.mxu0 %v225
        %290 = vmatprep.subr.bf16.mxu0 0
        %291 = vmatpush1.bf16.msra.mxu0 %v226
        %292 = vmatprep.subr.bf16.mxu0 0
        %293 = vmatpush1.bf16.msra.mxu0 0
        %294 = vmatprep.subr.bf16.mxu0 0
        %295 = vmatpush1.bf16.msra.mxu0 0
        %296 = vmatprep.subr.bf16.mxu0 0
        %297 = vmatpush1.bf16.msra.mxu0 0
        %298 = vmatprep.subr.bf16.mxu0 0
        %299 = vmatpush1.bf16.msra.mxu0 0
        %300 = vmatprep.subr.bf16.mxu0 0
        %301 = vmatpush1.bf16.msra.mxu0 0
        %302 = vmatprep.subr.bf16.mxu0 0
        %303 = vmatpush1.bf16.msra.mxu0 0
        %304 = vmatprep.subr.bf16.mxu0 0
        %305 = vmatpush1.bf16.msra.mxu0 0
        %306 = vmatprep.subr.bf16.mxu0 0
        %307 = vmatpush1.bf16.msra.mxu0 0
        %308 = vmatprep.subr.bf16.mxu0 0
        %309 = vmatpush1.bf16.msra.mxu0 0
        %310 = vmatprep.subr.bf16.mxu0 0
        %311 = vmatpush1.bf16.msra.mxu0 0
        %312 = vmatprep.subr.bf16.mxu0 0
        %313 = vmatpush1.bf16.msra.mxu0 0
        %314 = vmatprep.subr.bf16.mxu0 0
        %315 = vmatpush1.bf16.msra.mxu0 0
        %316 = vmatprep.mubr.bf16.mxu0 0
        %317 = vmatmul.mubr.bf16.gmra.mrb[0].mxu0 %v282
        %v318 = vpop.f32.mrb[0].mxu0
        %v319 = vadd.f32 0.0, %v318
        %v320 = vpop.f32.mrb[0].mxu0
        %v321 = vpop.f32.mrb[0].mxu0
        %v322 = vpop.f32.mrb[0].mxu0
        %323 = vdwg.mxu0
        %v324 = vadd.f32 %v279, %v319
        %v325 = vtanh.pop %v324
        %s326 = scalar_lea.vmem %s195, 8
        %v327 = vld [vmem:[%s326] sm:$0xf]
        %v328 = vunpack.c.l.bf16 %v327
        %v329 = vpack.c.bf16 %v325, %v325
        %v331 = vsel %vm231, %v329, 0
        %333 = vmatprep.subr.bf16.mxu0 0
        %334 = vmatpush1.bf16.msra.mxu0 %v223
        %335 = vmatprep.subr.bf16.mxu0 0
        %336 = vmatpush1.bf16.msra.mxu0 %v224
        %337 = vmatprep.subr.bf16.mxu0 0
        %338 = vmatpush1.bf16.msra.mxu0 %v225
        %339 = vmatprep.subr.bf16.mxu0 0
        %340 = vmatpush1.bf16.msra.mxu0 %v226
        %341 = vmatprep.subr.bf16.mxu0 0
        %342 = vmatpush1.bf16.msra.mxu0 0
        %343 = vmatprep.subr.bf16.mxu0 0
        %344 = vmatpush1.bf16.msra.mxu0 0
        %345 = vmatprep.subr.bf16.mxu0 0
        %346 = vmatpush1.bf16.msra.mxu0 0
        %347 = vmatprep.subr.bf16.mxu0 0
        %348 = vmatpush1.bf16.msra.mxu0 0
        %349 = vmatprep.subr.bf16.mxu0 0
        %350 = vmatpush1.bf16.msra.mxu0 0
        %351 = vmatprep.subr.bf16.mxu0 0
        %352 = vmatpush1.bf16.msra.mxu0 0
        %353 = vmatprep.subr.bf16.mxu0 0
        %354 = vmatpush1.bf16.msra.mxu0 0
        %355 = vmatprep.subr.bf16.mxu0 0
        %356 = vmatpush1.bf16.msra.mxu0 0
        %357 = vmatprep.subr.bf16.mxu0 0
        %358 = vmatpush1.bf16.msra.mxu0 0
        %359 = vmatprep.subr.bf16.mxu0 0
        %360 = vmatpush1.bf16.msra.mxu0 0
        %361 = vmatprep.subr.bf16.mxu0 0
        %362 = vmatpush1.bf16.msra.mxu0 0
        %363 = vmatprep.subr.bf16.mxu0 0
        %364 = vmatpush1.bf16.msra.mxu0 0
        %365 = vmatprep.mubr.bf16.mxu0 0
        %366 = vmatmul.mubr.bf16.gmra.mrb[0].mxu0 %v331
        %v367 = vpop.f32.mrb[0].mxu0
        %v368 = vadd.f32 0.0, %v367
        %v369 = vpop.f32.mrb[0].mxu0
        %v370 = vpop.f32.mrb[0].mxu0
        %v371 = vpop.f32.mrb[0].mxu0
        %372 = vdwg.mxu0
        %v373 = vadd.f32 %v328, %v368
        %v374 = vtanh.pop %v373
        %s375 = scalar_lea.vmem %s195, 12
        %v376 = vld [vmem:[%s375] sm:$0xf]
        %v377 = vunpack.c.l.bf16 %v376
        %v378 = vpack.c.bf16 %v374, %v374
        %v380 = vsel %vm231, %v378, 0
        %382 = vmatprep.subr.bf16.mxu0 0
        %383 = vmatpush1.bf16.msra.mxu0 %v223
        %384 = vmatprep.subr.bf16.mxu0 0
        %385 = vmatpush1.bf16.msra.mxu0 %v224
        %386 = vmatprep.subr.bf16.mxu0 0
        %387 = vmatpush1.bf16.msra.mxu0 %v225
        %388 = vmatprep.subr.bf16.mxu0 0
        %389 = vmatpush1.bf16.msra.mxu0 %v226
        %390 = vmatprep.subr.bf16.mxu0 0
        %391 = vmatpush1.bf16.msra.mxu0 0
        %392 = vmatprep.subr.bf16.mxu0 0
        %393 = vmatpush1.bf16.msra.mxu0 0
        %394 = vmatprep.subr.bf16.mxu0 0
        %395 = vmatpush1.bf16.msra.mxu0 0
        %396 = vmatprep.subr.bf16.mxu0 0
        %397 = vmatpush1.bf16.msra.mxu0 0
        %398 = vmatprep.subr.bf16.mxu0 0
        %399 = vmatpush1.bf16.msra.mxu0 0
        %400 = vmatprep.subr.bf16.mxu0 0
        %401 = vmatpush1.bf16.msra.mxu0 0
        %402 = vmatprep.subr.bf16.mxu0 0
        %403 = vmatpush1.bf16.msra.mxu0 0
        %404 = vmatprep.subr.bf16.mxu0 0
        %405 = vmatpush1.bf16.msra.mxu0 0
        %406 = vmatprep.subr.bf16.mxu0 0
        %407 = vmatpush1.bf16.msra.mxu0 0
        %408 = vmatprep.subr.bf16.mxu0 0
        %409 = vmatpush1.bf16.msra.mxu0 0
        %410 = vmatprep.subr.bf16.mxu0 0
        %411 = vmatpush1.bf16.msra.mxu0 0
        %412 = vmatprep.subr.bf16.mxu0 0
        %413 = vmatpush1.bf16.msra.mxu0 0
        %414 = vmatprep.mubr.bf16.mxu0 0
        %415 = vmatmul.mubr.bf16.gmra.mrb[0].mxu0 %v380
        %v416 = vpop.f32.mrb[0].mxu0
        %v417 = vadd.f32 0.0, %v416
        %v418 = vpop.f32.mrb[0].mxu0
        %v419 = vpop.f32.mrb[0].mxu0
        %v420 = vpop.f32.mrb[0].mxu0
        %421 = vdwg.mxu0
        %v422 = vadd.f32 %v377, %v417
        %v423 = vtanh.pop %v422
        %s424 = scalar_lea.vmem %s195, 16
        %v425 = vld [vmem:[%s424] sm:$0xf]
        %v426 = vunpack.c.l.bf16 %v425
        %v427 = vpack.c.bf16 %v423, %v423
        %v429 = vsel %vm231, %v427, 0
        %431 = vmatprep.subr.bf16.mxu0 0
        %432 = vmatpush1.bf16.msra.mxu0 %v223
        %433 = vmatprep.subr.bf16.mxu0 0
        %434 = vmatpush1.bf16.msra.mxu0 %v224
        %435 = vmatprep.subr.bf16.mxu0 0
        %436 = vmatpush1.bf16.msra.mxu0 %v225
        %437 = vmatprep.subr.bf16.mxu0 0
        %438 = vmatpush1.bf16.msra.mxu0 %v226
        %439 = vmatprep.subr.bf16.mxu0 0
        %440 = vmatpush1.bf16.msra.mxu0 0
        %441 = vmatprep.subr.bf16.mxu0 0
        %442 = vmatpush1.bf16.msra.mxu0 0
        %443 = vmatprep.subr.bf16.mxu0 0
        %444 = vmatpush1.bf16.msra.mxu0 0
        %445 = vmatprep.subr.bf16.mxu0 0
        %446 = vmatpush1.bf16.msra.mxu0 0
        %447 = vmatprep.subr.bf16.mxu0 0
        %448 = vmatpush1.bf16.msra.mxu0 0
        %449 = vmatprep.subr.bf16.mxu0 0
        %450 = vmatpush1.bf16.msra.mxu0 0
        %451 = vmatprep.subr.bf16.mxu0 0
        %452 = vmatpush1.bf16.msra.mxu0 0
        %453 = vmatprep.subr.bf16.mxu0 0
        %454 = vmatpush1.bf16.msra.mxu0 0
        %455 = vmatprep.subr.bf16.mxu0 0
        %456 = vmatpush1.bf16.msra.mxu0 0
        %457 = vmatprep.subr.bf16.mxu0 0
        %458 = vmatpush1.bf16.msra.mxu0 0
        %459 = vmatprep.subr.bf16.mxu0 0
        %460 = vmatpush1.bf16.msra.mxu0 0
        %461 = vmatprep.subr.bf16.mxu0 0
        %462 = vmatpush1.bf16.msra.mxu0 0
        %463 = vmatprep.mubr.bf16.mxu0 0
        %464 = vmatmul.mubr.bf16.gmra.mrb[0].mxu0 %v429
        %v465 = vpop.f32.mrb[0].mxu0
        %v466 = vadd.f32 0.0, %v465
        %v467 = vpop.f32.mrb[0].mxu0
        %v468 = vpop.f32.mrb[0].mxu0
        %v469 = vpop.f32.mrb[0].mxu0
        %470 = vdwg.mxu0
        %v471 = vadd.f32 %v426, %v466
        %v472 = vtanh.pop %v471
        %s473 = scalar_lea.vmem %s195, 20
        %v474 = vld [vmem:[%s473] sm:$0xf]
        %v475 = vunpack.c.l.bf16 %v474
        %v476 = vpack.c.bf16 %v472, %v472
        %v478 = vsel %vm231, %v476, 0
        %480 = vmatprep.subr.bf16.mxu0 0
        %481 = vmatpush1.bf16.msra.mxu0 %v223
        %482 = vmatprep.subr.bf16.mxu0 0
        %483 = vmatpush1.bf16.msra.mxu0 %v224
        %484 = vmatprep.subr.bf16.mxu0 0
        %485 = vmatpush1.bf16.msra.mxu0 %v225
        %486 = vmatprep.subr.bf16.mxu0 0
        %487 = vmatpush1.bf16.msra.mxu0 %v226
        %488 = vmatprep.subr.bf16.mxu0 0
        %489 = vmatpush1.bf16.msra.mxu0 0
        %490 = vmatprep.subr.bf16.mxu0 0
        %491 = vmatpush1.bf16.msra.mxu0 0
        %492 = vmatprep.subr.bf16.mxu0 0
        %493 = vmatpush1.bf16.msra.mxu0 0
        %494 = vmatprep.subr.bf16.mxu0 0
        %495 = vmatpush1.bf16.msra.mxu0 0
        %496 = vmatprep.subr.bf16.mxu0 0
        %497 = vmatpush1.bf16.msra.mxu0 0
        %498 = vmatprep.subr.bf16.mxu0 0
        %499 = vmatpush1.bf16.msra.mxu0 0
        %500 = vmatprep.subr.bf16.mxu0 0
        %501 = vmatpush1.bf16.msra.mxu0 0
        %502 = vmatprep.subr.bf16.mxu0 0
        %503 = vmatpush1.bf16.msra.mxu0 0
        %504 = vmatprep.subr.bf16.mxu0 0
        %505 = vmatpush1.bf16.msra.mxu0 0
        %506 = vmatprep.subr.bf16.mxu0 0
        %507 = vmatpush1.bf16.msra.mxu0 0
        %508 = vmatprep.subr.bf16.mxu0 0
        %509 = vmatpush1.bf16.msra.mxu0 0
        %510 = vmatprep.subr.bf16.mxu0 0
        %511 = vmatpush1.bf16.msra.mxu0 0
        %512 = vmatprep.mubr.bf16.mxu0 0
        %513 = vmatmul.mubr.bf16.gmra.mrb[0].mxu0 %v478
        %v514 = vpop.f32.mrb[0].mxu0
        %v515 = vadd.f32 0.0, %v514
        %v516 = vpop.f32.mrb[0].mxu0
        %v517 = vpop.f32.mrb[0].mxu0
        %v518 = vpop.f32.mrb[0].mxu0
        %519 = vdwg.mxu0
        %v520 = vadd.f32 %v475, %v515
        %v521 = vtanh.pop %v520
        %s522 = scalar_lea.vmem %s195, 24
        %v523 = vld [vmem:[%s522] sm:$0xf]
        %v524 = vunpack.c.l.bf16 %v523
        %v525 = vpack.c.bf16 %v521, %v521
        %v527 = vsel %vm231, %v525, 0
        %529 = vmatprep.subr.bf16.mxu0 0
        %530 = vmatpush1.bf16.msra.mxu0 %v223
        %531 = vmatprep.subr.bf16.mxu0 0
        %532 = vmatpush1.bf16.msra.mxu0 %v224
        %533 = vmatprep.subr.bf16.mxu0 0
        %534 = vmatpush1.bf16.msra.mxu0 %v225
        %535 = vmatprep.subr.bf16.mxu0 0
        %536 = vmatpush1.bf16.msra.mxu0 %v226
        %537 = vmatprep.subr.bf16.mxu0 0
        %538 = vmatpush1.bf16.msra.mxu0 0
        %539 = vmatprep.subr.bf16.mxu0 0
        %540 = vmatpush1.bf16.msra.mxu0 0
        %541 = vmatprep.subr.bf16.mxu0 0
        %542 = vmatpush1.bf16.msra.mxu0 0
        %543 = vmatprep.subr.bf16.mxu0 0
        %544 = vmatpush1.bf16.msra.mxu0 0
        %545 = vmatprep.subr.bf16.mxu0 0
        %546 = vmatpush1.bf16.msra.mxu0 0
        %547 = vmatprep.subr.bf16.mxu0 0
        %548 = vmatpush1.bf16.msra.mxu0 0
        %549 = vmatprep.subr.bf16.mxu0 0
        %550 = vmatpush1.bf16.msra.mxu0 0
        %551 = vmatprep.subr.bf16.mxu0 0
        %552 = vmatpush1.bf16.msra.mxu0 0
        %553 = vmatprep.subr.bf16.mxu0 0
        %554 = vmatpush1.bf16.msra.mxu0 0
        %555 = vmatprep.subr.bf16.mxu0 0
        %556 = vmatpush1.bf16.msra.mxu0 0
        %557 = vmatprep.subr.bf16.mxu0 0
        %558 = vmatpush1.bf16.msra.mxu0 0
        %559 = vmatprep.subr.bf16.mxu0 0
        %560 = vmatpush1.bf16.msra.mxu0 0
        %561 = vmatprep.mubr.bf16.mxu0 0
        %562 = vmatmul.mubr.bf16.gmra.mrb[0].mxu0 %v527
        %v563 = vpop.f32.mrb[0].mxu0
        %v564 = vadd.f32 0.0, %v563
        %v565 = vpop.f32.mrb[0].mxu0
        %v566 = vpop.f32.mrb[0].mxu0
        %v567 = vpop.f32.mrb[0].mxu0
        %568 = vdwg.mxu0
        %v569 = vadd.f32 %v524, %v564
        %v570 = vtanh.pop %v569
        %s571 = scalar_lea.vmem %s195, 28
        %v572 = vld [vmem:[%s571] sm:$0xf]
        %v573 = vunpack.c.l.bf16 %v572
        %v574 = vpack.c.bf16 %v570, %v570
        %v576 = vsel %vm231, %v574, 0
        %578 = vmatprep.subr.bf16.mxu0 0
        %579 = vmatpush1.bf16.msra.mxu0 %v223
        %580 = vmatprep.subr.bf16.mxu0 0
        %581 = vmatpush1.bf16.msra.mxu0 %v224
        %582 = vmatprep.subr.bf16.mxu0 0
        %583 = vmatpush1.bf16.msra.mxu0 %v225
        %584 = vmatprep.subr.bf16.mxu0 0
        %585 = vmatpush1.bf16.msra.mxu0 %v226
        %586 = vmatprep.subr.bf16.mxu0 0
        %587 = vmatpush1.bf16.msra.mxu0 0
        %588 = vmatprep.subr.bf16.mxu0 0
        %589 = vmatpush1.bf16.msra.mxu0 0
        %590 = vmatprep.subr.bf16.mxu0 0
        %591 = vmatpush1.bf16.msra.mxu0 0
        %592 = vmatprep.subr.bf16.mxu0 0
        %593 = vmatpush1.bf16.msra.mxu0 0
        %594 = vmatprep.subr.bf16.mxu0 0
        %595 = vmatpush1.bf16.msra.mxu0 0
        %596 = vmatprep.subr.bf16.mxu0 0
        %597 = vmatpush1.bf16.msra.mxu0 0
        %598 = vmatprep.subr.bf16.mxu0 0
        %599 = vmatpush1.bf16.msra.mxu0 0
        %600 = vmatprep.subr.bf16.mxu0 0
        %601 = vmatpush1.bf16.msra.mxu0 0
        %602 = vmatprep.subr.bf16.mxu0 0
        %603 = vmatpush1.bf16.msra.mxu0 0
        %604 = vmatprep.subr.bf16.mxu0 0
        %605 = vmatpush1.bf16.msra.mxu0 0
        %606 = vmatprep.subr.bf16.mxu0 0
        %607 = vmatpush1.bf16.msra.mxu0 0
        %608 = vmatprep.subr.bf16.mxu0 0
        %609 = vmatpush1.bf16.msra.mxu0 0
        %610 = vmatprep.mubr.bf16.mxu0 0
        %611 = vmatmul.mubr.bf16.gmra.mrb[0].mxu0 %v576
        %v612 = vpop.f32.mrb[0].mxu0
        %v613 = vadd.f32 0.0, %v612
        %v614 = vpop.f32.mrb[0].mxu0
        %v615 = vpop.f32.mrb[0].mxu0
        %v616 = vpop.f32.mrb[0].mxu0
        %617 = vdwg.mxu0
        %v618 = vadd.f32 %v573, %v613
        %v619 = vtanh.pop %v618
        %s620 = scalar_lea.vmem %s195, 32
        %v621 = vld [vmem:[%s620] sm:$0xf]
        %v622 = vunpack.c.l.bf16 %v621
        %v623 = vpack.c.bf16 %v619, %v619
        %v625 = vsel %vm231, %v623, 0
        %627 = vmatprep.subr.bf16.mxu0 0
        %628 = vmatpush1.bf16.msra.mxu0 %v223
        %629 = vmatprep.subr.bf16.mxu0 0
        %630 = vmatpush1.bf16.msra.mxu0 %v224
        %631 = vmatprep.subr.bf16.mxu0 0
        %632 = vmatpush1.bf16.msra.mxu0 %v225
        %633 = vmatprep.subr.bf16.mxu0 0
        %634 = vmatpush1.bf16.msra.mxu0 %v226
        %635 = vmatprep.subr.bf16.mxu0 0
        %636 = vmatpush1.bf16.msra.mxu0 0
        %637 = vmatprep.subr.bf16.mxu0 0
        %638 = vmatpush1.bf16.msra.mxu0 0
        %639 = vmatprep.subr.bf16.mxu0 0
        %640 = vmatpush1.bf16.msra.mxu0 0
        %641 = vmatprep.subr.bf16.mxu0 0
        %642 = vmatpush1.bf16.msra.mxu0 0
        %643 = vmatprep.subr.bf16.mxu0 0
        %644 = vmatpush1.bf16.msra.mxu0 0
        %645 = vmatprep.subr.bf16.mxu0 0
        %646 = vmatpush1.bf16.msra.mxu0 0
        %647 = vmatprep.subr.bf16.mxu0 0
        %648 = vmatpush1.bf16.msra.mxu0 0
        %649 = vmatprep.subr.bf16.mxu0 0
        %650 = vmatpush1.bf16.msra.mxu0 0
        %651 = vmatprep.subr.bf16.mxu0 0
        %652 = vmatpush1.bf16.msra.mxu0 0
        %653 = vmatprep.subr.bf16.mxu0 0
        %654 = vmatpush1.bf16.msra.mxu0 0
        %655 = vmatprep.subr.bf16.mxu0 0
        %656 = vmatpush1.bf16.msra.mxu0 0
        %657 = vmatprep.subr.bf16.mxu0 0
        %658 = vmatpush1.bf16.msra.mxu0 0
        %659 = vmatprep.mubr.bf16.mxu0 0
        %660 = vmatmul.mubr.bf16.gmra.mrb[0].mxu0 %v625
        %v661 = vpop.f32.mrb[0].mxu0
        %v662 = vadd.f32 0.0, %v661
        %v663 = vpop.f32.mrb[0].mxu0
        %v664 = vpop.f32.mrb[0].mxu0
        %v665 = vpop.f32.mrb[0].mxu0
        %666 = vdwg.mxu0
        %v667 = vadd.f32 %v622, %v662
        %v668 = vtanh.pop %v667
        %s669 = scalar_lea.vmem %s195, 36
        %v670 = vld [vmem:[%s669] sm:$0xf]
        %v671 = vunpack.c.l.bf16 %v670
        %v672 = vpack.c.bf16 %v668, %v668
        %v674 = vsel %vm231, %v672, 0
        %676 = vmatprep.subr.bf16.mxu0 0
        %677 = vmatpush1.bf16.msra.mxu0 %v223
        %678 = vmatprep.subr.bf16.mxu0 0
        %679 = vmatpush1.bf16.msra.mxu0 %v224
        %680 = vmatprep.subr.bf16.mxu0 0
        %681 = vmatpush1.bf16.msra.mxu0 %v225
        %682 = vmatprep.subr.bf16.mxu0 0
        %683 = vmatpush1.bf16.msra.mxu0 %v226
        %684 = vmatprep.subr.bf16.mxu0 0
        %685 = vmatpush1.bf16.msra.mxu0 0
        %686 = vmatprep.subr.bf16.mxu0 0
        %687 = vmatpush1.bf16.msra.mxu0 0
        %688 = vmatprep.subr.bf16.mxu0 0
        %689 = vmatpush1.bf16.msra.mxu0 0
        %690 = vmatprep.subr.bf16.mxu0 0
        %691 = vmatpush1.bf16.msra.mxu0 0
        %692 = vmatprep.subr.bf16.mxu0 0
        %693 = vmatpush1.bf16.msra.mxu0 0
        %694 = vmatprep.subr.bf16.mxu0 0
        %695 = vmatpush1.bf16.msra.mxu0 0
        %696 = vmatprep.subr.bf16.mxu0 0
        %697 = vmatpush1.bf16.msra.mxu0 0
        %698 = vmatprep.subr.bf16.mxu0 0
        %699 = vmatpush1.bf16.msra.mxu0 0
        %700 = vmatprep.subr.bf16.mxu0 0
        %701 = vmatpush1.bf16.msra.mxu0 0
        %702 = vmatprep.subr.bf16.mxu0 0
        %703 = vmatpush1.bf16.msra.mxu0 0
        %704 = vmatprep.subr.bf16.mxu0 0
        %705 = vmatpush1.bf16.msra.mxu0 0
        %706 = vmatprep.subr.bf16.mxu0 0
        %707 = vmatpush1.bf16.msra.mxu0 0
        %708 = vmatprep.mubr.bf16.mxu0 0
        %709 = vmatmul.mubr.bf16.gmra.mrb[0].mxu0 %v674
        %v710 = vpop.f32.mrb[0].mxu0
        %v711 = vadd.f32 0.0, %v710
        %v712 = vpop.f32.mrb[0].mxu0
        %v713 = vpop.f32.mrb[0].mxu0
        %v714 = vpop.f32.mrb[0].mxu0
        %715 = vdwg.mxu0
        %v716 = vadd.f32 %v671, %v711
        %v717 = vtanh.pop %v716
        %s718 = scalar_lea.vmem %s195, 40
        %v719 = vld [vmem:[%s718] sm:$0xf]
        %v720 = vunpack.c.l.bf16 %v719
        %v721 = vpack.c.bf16 %v717, %v717
        %v723 = vsel %vm231, %v721, 0
        %725 = vmatprep.subr.bf16.mxu0 0
        %726 = vmatpush1.bf16.msra.mxu0 %v223
        %727 = vmatprep.subr.bf16.mxu0 0
        %728 = vmatpush1.bf16.msra.mxu0 %v224
        %729 = vmatprep.subr.bf16.mxu0 0
        %730 = vmatpush1.bf16.msra.mxu0 %v225
        %731 = vmatprep.subr.bf16.mxu0 0
        %732 = vmatpush1.bf16.msra.mxu0 %v226
        %733 = vmatprep.subr.bf16.mxu0 0
        %734 = vmatpush1.bf16.msra.mxu0 0
        %735 = vmatprep.subr.bf16.mxu0 0
        %736 = vmatpush1.bf16.msra.mxu0 0
        %737 = vmatprep.subr.bf16.mxu0 0
        %738 = vmatpush1.bf16.msra.mxu0 0
        %739 = vmatprep.subr.bf16.mxu0 0
        %740 = vmatpush1.bf16.msra.mxu0 0
        %741 = vmatprep.subr.bf16.mxu0 0
        %742 = vmatpush1.bf16.msra.mxu0 0
        %743 = vmatprep.subr.bf16.mxu0 0
        %744 = vmatpush1.bf16.msra.mxu0 0
        %745 = vmatprep.subr.bf16.mxu0 0
        %746 = vmatpush1.bf16.msra.mxu0 0
        %747 = vmatprep.subr.bf16.mxu0 0
        %748 = vmatpush1.bf16.msra.mxu0 0
        %749 = vmatprep.subr.bf16.mxu0 0
        %750 = vmatpush1.bf16.msra.mxu0 0
        %751 = vmatprep.subr.bf16.mxu0 0
        %752 = vmatpush1.bf16.msra.mxu0 0
        %753 = vmatprep.subr.bf16.mxu0 0
        %754 = vmatpush1.bf16.msra.mxu0 0
        %755 = vmatprep.subr.bf16.mxu0 0
        %756 = vmatpush1.bf16.msra.mxu0 0
        %757 = vmatprep.mubr.bf16.mxu0 0
        %758 = vmatmul.mubr.bf16.gmra.mrb[0].mxu0 %v723
        %v759 = vpop.f32.mrb[0].mxu0
        %v760 = vadd.f32 0.0, %v759
        %v761 = vpop.f32.mrb[0].mxu0
        %v762 = vpop.f32.mrb[0].mxu0
        %v763 = vpop.f32.mrb[0].mxu0
        %764 = vdwg.mxu0
        %v765 = vadd.f32 %v720, %v760
        %v766 = vtanh.pop %v765
        %s767 = scalar_lea.vmem %s195, 44
        %v768 = vld [vmem:[%s767] sm:$0xf]
        %v769 = vunpack.c.l.bf16 %v768
        %v770 = vpack.c.bf16 %v766, %v766
        %v772 = vsel %vm231, %v770, 0
        %774 = vmatprep.subr.bf16.mxu0 0
        %775 = vmatpush1.bf16.msra.mxu0 %v223
        %776 = vmatprep.subr.bf16.mxu0 0
        %777 = vmatpush1.bf16.msra.mxu0 %v224
        %778 = vmatprep.subr.bf16.mxu0 0
        %779 = vmatpush1.bf16.msra.mxu0 %v225
        %780 = vmatprep.subr.bf16.mxu0 0
        %781 = vmatpush1.bf16.msra.mxu0 %v226
        %782 = vmatprep.subr.bf16.mxu0 0
        %783 = vmatpush1.bf16.msra.mxu0 0
        %784 = vmatprep.subr.bf16.mxu0 0
        %785 = vmatpush1.bf16.msra.mxu0 0
        %786 = vmatprep.subr.bf16.mxu0 0
        %787 = vmatpush1.bf16.msra.mxu0 0
        %788 = vmatprep.subr.bf16.mxu0 0
        %789 = vmatpush1.bf16.msra.mxu0 0
        %790 = vmatprep.subr.bf16.mxu0 0
        %791 = vmatpush1.bf16.msra.mxu0 0
        %792 = vmatprep.subr.bf16.mxu0 0
        %793 = vmatpush1.bf16.msra.mxu0 0
        %794 = vmatprep.subr.bf16.mxu0 0
        %795 = vmatpush1.bf16.msra.mxu0 0
        %796 = vmatprep.subr.bf16.mxu0 0
        %797 = vmatpush1.bf16.msra.mxu0 0
        %798 = vmatprep.subr.bf16.mxu0 0
        %799 = vmatpush1.bf16.msra.mxu0 0
        %800 = vmatprep.subr.bf16.mxu0 0
        %801 = vmatpush1.bf16.msra.mxu0 0
        %802 = vmatprep.subr.bf16.mxu0 0
        %803 = vmatpush1.bf16.msra.mxu0 0
        %804 = vmatprep.subr.bf16.mxu0 0
        %805 = vmatpush1.bf16.msra.mxu0 0
        %806 = vmatprep.mubr.bf16.mxu0 0
        %807 = vmatmul.mubr.bf16.gmra.mrb[0].mxu0 %v772
        %v808 = vpop.f32.mrb[0].mxu0
        %v809 = vadd.f32 0.0, %v808
        %v810 = vpop.f32.mrb[0].mxu0
        %v811 = vpop.f32.mrb[0].mxu0
        %v812 = vpop.f32.mrb[0].mxu0
        %813 = vdwg.mxu0
        %v814 = vadd.f32 %v769, %v809
        %v815 = vtanh.pop %v814
        %s816 = scalar_lea.vmem %s195, 48
        %v817 = vld [vmem:[%s816] sm:$0xf]
        %v818 = vunpack.c.l.bf16 %v817
        %v819 = vpack.c.bf16 %v815, %v815
        %v821 = vsel %vm231, %v819, 0
        %823 = vmatprep.subr.bf16.mxu0 0
        %824 = vmatpush1.bf16.msra.mxu0 %v223
        %825 = vmatprep.subr.bf16.mxu0 0
        %826 = vmatpush1.bf16.msra.mxu0 %v224
        %827 = vmatprep.subr.bf16.mxu0 0
        %828 = vmatpush1.bf16.msra.mxu0 %v225
        %829 = vmatprep.subr.bf16.mxu0 0
        %830 = vmatpush1.bf16.msra.mxu0 %v226
        %831 = vmatprep.subr.bf16.mxu0 0
        %832 = vmatpush1.bf16.msra.mxu0 0
        %833 = vmatprep.subr.bf16.mxu0 0
        %834 = vmatpush1.bf16.msra.mxu0 0
        %835 = vmatprep.subr.bf16.mxu0 0
        %836 = vmatpush1.bf16.msra.mxu0 0
        %837 = vmatprep.subr.bf16.mxu0 0
        %838 = vmatpush1.bf16.msra.mxu0 0
        %839 = vmatprep.subr.bf16.mxu0 0
        %840 = vmatpush1.bf16.msra.mxu0 0
        %841 = vmatprep.subr.bf16.mxu0 0
        %842 = vmatpush1.bf16.msra.mxu0 0
        %843 = vmatprep.subr.bf16.mxu0 0
        %844 = vmatpush1.bf16.msra.mxu0 0
        %845 = vmatprep.subr.bf16.mxu0 0
        %846 = vmatpush1.bf16.msra.mxu0 0
        %847 = vmatprep.subr.bf16.mxu0 0
        %848 = vmatpush1.bf16.msra.mxu0 0
        %849 = vmatprep.subr.bf16.mxu0 0
        %850 = vmatpush1.bf16.msra.mxu0 0
        %851 = vmatprep.subr.bf16.mxu0 0
        %852 = vmatpush1.bf16.msra.mxu0 0
        %853 = vmatprep.subr.bf16.mxu0 0
        %854 = vmatpush1.bf16.msra.mxu0 0
        %855 = vmatprep.mubr.bf16.mxu0 0
        %856 = vmatmul.mubr.bf16.gmra.mrb[0].mxu0 %v821
        %v857 = vpop.f32.mrb[0].mxu0
        %v858 = vadd.f32 0.0, %v857
        %v859 = vpop.f32.mrb[0].mxu0
        %v860 = vpop.f32.mrb[0].mxu0
        %v861 = vpop.f32.mrb[0].mxu0
        %862 = vdwg.mxu0
        %v863 = vadd.f32 %v818, %v858
        %v864 = vtanh.pop %v863
        %s865 = scalar_lea.vmem %s195, 52
        %v866 = vld [vmem:[%s865] sm:$0xf]
        %v867 = vunpack.c.l.bf16 %v866
        %v868 = vpack.c.bf16 %v864, %v864
        %v870 = vsel %vm231, %v868, 0
        %872 = vmatprep.subr.bf16.mxu0 0
        %873 = vmatpush1.bf16.msra.mxu0 %v223
        %874 = vmatprep.subr.bf16.mxu0 0
        %875 = vmatpush1.bf16.msra.mxu0 %v224
        %876 = vmatprep.subr.bf16.mxu0 0
        %877 = vmatpush1.bf16.msra.mxu0 %v225
        %878 = vmatprep.subr.bf16.mxu0 0
        %879 = vmatpush1.bf16.msra.mxu0 %v226
        %880 = vmatprep.subr.bf16.mxu0 0
        %881 = vmatpush1.bf16.msra.mxu0 0
        %882 = vmatprep.subr.bf16.mxu0 0
        %883 = vmatpush1.bf16.msra.mxu0 0
        %884 = vmatprep.subr.bf16.mxu0 0
        %885 = vmatpush1.bf16.msra.mxu0 0
        %886 = vmatprep.subr.bf16.mxu0 0
        %887 = vmatpush1.bf16.msra.mxu0 0
        %888 = vmatprep.subr.bf16.mxu0 0
        %889 = vmatpush1.bf16.msra.mxu0 0
        %890 = vmatprep.subr.bf16.mxu0 0
        %891 = vmatpush1.bf16.msra.mxu0 0
        %892 = vmatprep.subr.bf16.mxu0 0
        %893 = vmatpush1.bf16.msra.mxu0 0
        %894 = vmatprep.subr.bf16.mxu0 0
        %895 = vmatpush1.bf16.msra.mxu0 0
        %896 = vmatprep.subr.bf16.mxu0 0
        %897 = vmatpush1.bf16.msra.mxu0 0
        %898 = vmatprep.subr.bf16.mxu0 0
        %899 = vmatpush1.bf16.msra.mxu0 0
        %900 = vmatprep.subr.bf16.mxu0 0
        %901 = vmatpush1.bf16.msra.mxu0 0
        %902 = vmatprep.subr.bf16.mxu0 0
        %903 = vmatpush1.bf16.msra.mxu0 0
        %904 = vmatprep.mubr.bf16.mxu0 0
        %905 = vmatmul.mubr.bf16.gmra.mrb[0].mxu0 %v870
        %v906 = vpop.f32.mrb[0].mxu0
        %v907 = vadd.f32 0.0, %v906
        %v908 = vpop.f32.mrb[0].mxu0
        %v909 = vpop.f32.mrb[0].mxu0
        %v910 = vpop.f32.mrb[0].mxu0
        %911 = vdwg.mxu0
        %v912 = vadd.f32 %v867, %v907
        %v913 = vtanh.pop %v912
        %s914 = scalar_lea.vmem %s195, 56
        %v915 = vld [vmem:[%s914] sm:$0xf]
        %v916 = vunpack.c.l.bf16 %v915
        %v917 = vpack.c.bf16 %v913, %v913
        %v919 = vsel %vm231, %v917, 0
        %921 = vmatprep.subr.bf16.mxu0 0
        %922 = vmatpush1.bf16.msra.mxu0 %v223
        %923 = vmatprep.subr.bf16.mxu0 0
        %924 = vmatpush1.bf16.msra.mxu0 %v224
        %925 = vmatprep.subr.bf16.mxu0 0
        %926 = vmatpush1.bf16.msra.mxu0 %v225
        %927 = vmatprep.subr.bf16.mxu0 0
        %928 = vmatpush1.bf16.msra.mxu0 %v226
        %929 = vmatprep.subr.bf16.mxu0 0
        %930 = vmatpush1.bf16.msra.mxu0 0
        %931 = vmatprep.subr.bf16.mxu0 0
        %932 = vmatpush1.bf16.msra.mxu0 0
        %933 = vmatprep.subr.bf16.mxu0 0
        %934 = vmatpush1.bf16.msra.mxu0 0
        %935 = vmatprep.subr.bf16.mxu0 0
        %936 = vmatpush1.bf16.msra.mxu0 0
        %937 = vmatprep.subr.bf16.mxu0 0
        %938 = vmatpush1.bf16.msra.mxu0 0
        %939 = vmatprep.subr.bf16.mxu0 0
        %940 = vmatpush1.bf16.msra.mxu0 0
        %941 = vmatprep.subr.bf16.mxu0 0
        %942 = vmatpush1.bf16.msra.mxu0 0
        %943 = vmatprep.subr.bf16.mxu0 0
        %944 = vmatpush1.bf16.msra.mxu0 0
        %945 = vmatprep.subr.bf16.mxu0 0
        %946 = vmatpush1.bf16.msra.mxu0 0
        %947 = vmatprep.subr.bf16.mxu0 0
        %948 = vmatpush1.bf16.msra.mxu0 0
        %949 = vmatprep.subr.bf16.mxu0 0
        %950 = vmatpush1.bf16.msra.mxu0 0
        %951 = vmatprep.subr.bf16.mxu0 0
        %952 = vmatpush1.bf16.msra.mxu0 0
        %953 = vmatprep.mubr.bf16.mxu0 0
        %954 = vmatmul.mubr.bf16.gmra.mrb[0].mxu0 %v919
        %v955 = vpop.f32.mrb[0].mxu0
        %v956 = vadd.f32 0.0, %v955
        %v957 = vpop.f32.mrb[0].mxu0
        %v958 = vpop.f32.mrb[0].mxu0
        %v959 = vpop.f32.mrb[0].mxu0
        %960 = vdwg.mxu0
        %v961 = vadd.f32 %v916, %v956
        %v962 = vtanh.pop %v961
        %s963 = scalar_lea.vmem %s195, 60
        %v964 = vld [vmem:[%s963] sm:$0xf]
        %v965 = vunpack.c.l.bf16 %v964
        %v966 = vpack.c.bf16 %v962, %v962
        %v968 = vsel %vm231, %v966, 0
        %970 = vmatprep.subr.bf16.mxu0 0
        %971 = vmatpush1.bf16.msra.mxu0 %v223
        %972 = vmatprep.subr.bf16.mxu0 0
        %973 = vmatpush1.bf16.msra.mxu0 %v224
        %974 = vmatprep.subr.bf16.mxu0 0
        %975 = vmatpush1.bf16.msra.mxu0 %v225
        %976 = vmatprep.subr.bf16.mxu0 0
        %977 = vmatpush1.bf16.msra.mxu0 %v226
        %978 = vmatprep.subr.bf16.mxu0 0
        %979 = vmatpush1.bf16.msra.mxu0 0
        %980 = vmatprep.subr.bf16.mxu0 0
        %981 = vmatpush1.bf16.msra.mxu0 0
        %982 = vmatprep.subr.bf16.mxu0 0
        %983 = vmatpush1.bf16.msra.mxu0 0
        %984 = vmatprep.subr.bf16.mxu0 0
        %985 = vmatpush1.bf16.msra.mxu0 0
        %986 = vmatprep.subr.bf16.mxu0 0
        %987 = vmatpush1.bf16.msra.mxu0 0
        %988 = vmatprep.subr.bf16.mxu0 0
        %989 = vmatpush1.bf16.msra.mxu0 0
        %990 = vmatprep.subr.bf16.mxu0 0
        %991 = vmatpush1.bf16.msra.mxu0 0
        %992 = vmatprep.subr.bf16.mxu0 0
        %993 = vmatpush1.bf16.msra.mxu0 0
        %994 = vmatprep.subr.bf16.mxu0 0
        %995 = vmatpush1.bf16.msra.mxu0 0
        %996 = vmatprep.subr.bf16.mxu0 0
        %997 = vmatpush1.bf16.msra.mxu0 0
        %998 = vmatprep.subr.bf16.mxu0 0
        %999 = vmatpush1.bf16.msra.mxu0 0
        %1000 = vmatprep.subr.bf16.mxu0 0
        %1001 = vmatpush1.bf16.msra.mxu0 0
        %1002 = vmatprep.mubr.bf16.mxu0 0
        %1003 = vmatmul.mubr.bf16.gmra.mrb[0].mxu0 %v968
        %v1004 = vpop.f32.mrb[0].mxu0
        %v1005 = vadd.f32 0.0, %v1004
        %v1006 = vpop.f32.mrb[0].mxu0
        %v1007 = vpop.f32.mrb[0].mxu0
        %v1008 = vpop.f32.mrb[0].mxu0
        %1009 = vdwg.mxu0
        %v1010 = vadd.f32 %v965, %v1005
        %v1011 = vtanh.pop %v1010
        %v1012 = vpack.c.bf16 %v1011, %v1011
        %v1013 = vld [vmem:[%s2] sm:$0xf]
        %v1014 = vld [vmem:[%s2 + $0x4] sm:$0xf]
        %v1015 = vld [vmem:[%s2 + $0x8] sm:$0xf]
        %v1016 = vld [vmem:[%s2 + $0xc] sm:$0xf]
        %v1017 = vld [vmem:[%s2 + $0x10] sm:$0xf]
        %v1018 = vld [vmem:[%s2 + $0x14] sm:$0xf]
        %v1019 = vld [vmem:[%s2 + $0x18] sm:$0xf]
        %v1020 = vld [vmem:[%s2 + $0x1c] sm:$0xf]
        %v1021 = vld [vmem:[%s3] sm:$0x1]
        %v1023 = vlaneseq
        %v1024 = vshrl.u32 %v1023, 7
        %v1025 = vsub.s32 0, %v1024
        %v1026 = vrot.slane %v1021, %v1025
        %v1036 = vunpack.c.l.b16 %v1013
        %v1037 = vunpack.c.l.b16 %v1014
        %v1038 = vunpack.c.l.b16 %v1015
        %v1039 = vunpack.c.l.b16 %v1016
        %v1040 = vunpack.c.l.b16 %v1017
        %v1041 = vunpack.c.l.b16 %v1018
        %v1042 = vunpack.c.l.b16 %v1019
        %v1043 = vunpack.c.l.b16 %v1020
        %v1044 = vpack.c.b16 %v1037, %v1036
        %v1045 = vpack.c.b16 %v1039, %v1038
        %v1046 = vpack.c.b16 %v1041, %v1040
        %v1047 = vpack.c.b16 %v1043, %v1042
        %v1053 = vsel %vm231, %v1012, 0
        %1055 = vmatprep.subr.bf16.mxu0 0
        %1056 = vmatpush1.bf16.msra.mxu0 %v1044
        %1057 = vmatprep.subr.bf16.mxu0 0
        %1058 = vmatpush1.bf16.msra.mxu0 %v1045
        %1059 = vmatprep.subr.bf16.mxu0 0
        %1060 = vmatpush1.bf16.msra.mxu0 %v1046
        %1061 = vmatprep.subr.bf16.mxu0 0
        %1062 = vmatpush1.bf16.msra.mxu0 %v1047
        %1063 = vmatprep.subr.bf16.mxu0 0
        %1064 = vmatpush1.bf16.msra.mxu0 0
        %1065 = vmatprep.subr.bf16.mxu0 0
        %1066 = vmatpush1.bf16.msra.mxu0 0
        %1067 = vmatprep.subr.bf16.mxu0 0
        %1068 = vmatpush1.bf16.msra.mxu0 0
        %1069 = vmatprep.subr.bf16.mxu0 0
        %1070 = vmatpush1.bf16.msra.mxu0 0
        %1071 = vmatprep.subr.bf16.mxu0 0
        %1072 = vmatpush1.bf16.msra.mxu0 0
        %1073 = vmatprep.subr.bf16.mxu0 0
        %1074 = vmatpush1.bf16.msra.mxu0 0
        %1075 = vmatprep.subr.bf16.mxu0 0
        %1076 = vmatpush1.bf16.msra.mxu0 0
        %1077 = vmatprep.subr.bf16.mxu0 0
        %1078 = vmatpush1.bf16.msra.mxu0 0
        %1079 = vmatprep.subr.bf16.mxu0 0
        %1080 = vmatpush1.bf16.msra.mxu0 0
        %1081 = vmatprep.subr.bf16.mxu0 0
        %1082 = vmatpush1.bf16.msra.mxu0 0
        %1083 = vmatprep.subr.bf16.mxu0 0
        %1084 = vmatpush1.bf16.msra.mxu0 0
        %1085 = vmatprep.subr.bf16.mxu0 0
        %1086 = vmatpush1.bf16.msra.mxu0 0
        %1087 = vmatprep.mubr.bf16.mxu0 0
        %1088 = vmatmul.mubr.bf16.gmra.mrb[0].mxu0 %v1053
        %v1089 = vpop.f32.mrb[0].mxu0
        %v1090 = vadd.f32 %v1026, %v1089
        %v1091 = vpop.f32.mrb[0].mxu0
        %v1092 = vpop.f32.mrb[0].mxu0
        %v1093 = vpop.f32.mrb[0].mxu0
        %1094 = vdwg.mxu0
        %1095 = vmax.xlane.f32.xlu0 %v1090
        %v1096 = vpop.xlane.xlu0 %1095
        %v1097 = vsub.f32 %v1090, %v1096
        %v1098 = vmul.f32 %v1097, 1.442695
        %v1099 = vpow.pop %v1098
        %1100 = vadd.xlane.f32.xlu0 %v1099
        %v1101 = vpop.xlane.xlu0 %1100
        %v1102 = vrcp.pop %v1101
        %v1103 = vmul.f32 %v1099, %v1102
        %1104 = vst [vmem:[%s190] sm:$0xff] %v1103
        %s1105 = sand.u32 %s115, 1
        %s1106 = scalar_lea.sflag [#allocation3], %s1105
        %s1107 = sand.u32 %s115, 1
        %s1108 = smul.addr %s1107, 8
        %s1109 = scalar_lea.vmem [#allocation2], %s1108
        // Predicated region
        $region37: #{tpu_custom_call.1} parent=35 // pred_check
          %p1110 = pneg %p125
        $region38: #{tpu_custom_call.1} parent=35 // pred_check_branch
          %1112 = sbr.rel (%p1110) target = $region40
        $region39: #{tpu_custom_call.1} parent=35 // pred_region
          %s1114 = ssub.s32 128, 128
          %1115 = vsyncadd %s1106, %s1114
          %s1116 = smul.addr %s18, 128
          %s1117 = scalar_lea.hbm %s4, %s1116
          %s1119 = sshll.u32 %s1109, 4
          %s1120 = int_to_ptr.vmem [resolvable:$true] %s1119
          %1122 = dma.vmem_to_hbm [thread:$0]  %s1120, 128, %s1117, %s1106
        $region40: #{tpu_custom_call.1} parent=35 // pred_fallthru
          _
      $region36: #{tpu_custom_call.1} parent=5 // pred_fallthru
        _
      %p1123 = scmp.le.s32.totalorder 2, %s13
      // Predicated region
      $region41: #{tpu_custom_call.1} parent=5 // pred_check
        %p1124 = pneg %p1123
      $region42: #{tpu_custom_call.1} parent=5 // pred_check_branch
        %1126 = sbr.rel (%p1124) target = $region44
      $region43: #{tpu_custom_call.1} parent=5 // pred_region
        %s1127 = ssub.s32 %s13, 2
        // Predicated region
        $region45: #{tpu_custom_call.1} parent=43 // pred_check
          %p1128 = pneg %p131
        $region46: #{tpu_custom_call.1} parent=43 // pred_check_branch
          %1130 = sbr.rel (%p1128) target = $region48
        $region47: #{tpu_custom_call.1} parent=43 // pred_region
          %s1131 = sand.u32 %s116, 1
          %s1132 = scalar_lea.sflag [#allocation3], %s1131
          %s1133 = sand.u32 %s116, 1
          %s1134 = smul.addr %s1133, 8
          %s1135 = scalar_lea.vmem [#allocation2], %s1134
          %1136 = dma.done %s1132, 128
        $region48: #{tpu_custom_call.1} parent=43 // pred_fallthru
          _
      $region44: #{tpu_custom_call.1} parent=5 // pred_fallthru
        _
    $region6: #{tpu_custom_call.1} parent=1 // loop_footer
      %s17 = sadd.s32 1, %s13
    $region7: #{tpu_custom_call.1} parent=1 // loop_footer_branch
      %12 = sbr.rel target = $region3
    $region8: #{tpu_custom_call.1} parent=1 // loop_exit
      _
    %1137 = vsyncpa [#allocation3], 1
    %s1138 = scalar_lea.sflag [#allocation3], 1
    %1139 = vsyncpa %s1138, 1

</llo_original>
